<compile_context>
chip_gen: v7x
topology: tpu7x:2x2x1
jax: 0.10.0
libtpu: 0.0.40
codegen_flags: <defaults>
</compile_context>

<pallas_src>
import functools
import math

import jax
import jax.numpy as jnp
from jax.experimental import pallas as pl
from jax.experimental.pallas import tpu as pltpu


_VMEM_CAP = 32 * 1024 * 1024      # safe scoped-VMEM ceiling across v5e/v6e/v7x
_MATMUL_TILE = 256                # feeds the 256-wide MXU on v6e/v7x, = 2x128 on v5e
_SEQ_TILE = 256                   # q / kv tile length for the flash kernel


def _tile(dim, target):
    """Largest clean tile: `target` if it divides `dim`, else the full dim
    (keeps the (8,128) BlockSpec divisibility rule satisfied for small demos)."""
    return target if dim % target == 0 else dim


def _estimate_vmem(io_blocks, scratch_blocks, headroom=2.0):
    """Scoped-VMEM budget: double-buffered I/O blocks + scratch, with headroom."""
    def nbytes(shape, dtype):
        return math.prod(shape) * jnp.dtype(dtype).itemsize
    total = sum(2 * nbytes(s, d) for s, d in io_blocks)
    total += sum(nbytes(s, d) for s, d in scratch_blocks)
    total = int(total * headroom)
    return max(min(total, _VMEM_CAP), 4 * 1024 * 1024)


# ----------------------------------------------------------------------------
# Tiled matmul + bias  (used for the QKV projection and the output projection)
# ----------------------------------------------------------------------------
def _matmul_bias_kernel(x_ref, w_ref, b_ref, o_ref, acc_ref):
    k = pl.program_id(2)

    @pl.when(k == 0)
    def _init():
        acc_ref[...] = jnp.zeros(acc_ref.shape, jnp.float32)

    # Native-dtype operands on the MXU, f32 accumulation.
    acc_ref[...] += jnp.dot(x_ref[...], w_ref[...],
                            preferred_element_type=jnp.float32)

    @pl.when(k == pl.num_programs(2) - 1)
    def _finalize():
        out = acc_ref[...] + b_ref[...].astype(jnp.float32)   # (tm,tn)+(1,tn)
        o_ref[...] = out.astype(o_ref.dtype)


def _linear_bias(x, w, b, *, tile=_MATMUL_TILE):
    """y = x @ w + b with x:(M,K), w:(K,N), b:(N,) -> (M,N)."""
    M, K = x.shape
    Kw, N = w.shape
    assert K == Kw and b.shape == (N,)
    tm, tn, tk = _tile(M, tile), _tile(N, tile), _tile(K, tile)

    vmem_limit = _estimate_vmem(
        io_blocks=[((tm, tk), x.dtype), ((tk, tn), w.dtype),
                   ((1, tn), b.dtype), ((tm, tn), x.dtype)],
        scratch_blocks=[((tm, tn), jnp.float32)])

    return pl.pallas_call(
        _matmul_bias_kernel,
        out_shape=jax.ShapeDtypeStruct((M, N), x.dtype),
        grid_spec=pltpu.PrefetchScalarGridSpec(
            num_scalar_prefetch=0,
            grid=(M // tm, N // tn, K // tk),
            in_specs=[
                pl.BlockSpec((tm, tk), lambda i, j, k: (i, k)),
                pl.BlockSpec((tk, tn), lambda i, j, k: (k, j)),
                pl.BlockSpec((1, tn), lambda i, j, k: (0, j)),
            ],
            out_specs=pl.BlockSpec((tm, tn), lambda i, j, k: (i, j)),
            scratch_shapes=[pltpu.VMEM((tm, tn), jnp.float32)],
        ),
        compiler_params=pltpu.CompilerParams(
            dimension_semantics=("parallel", "parallel", "arbitrary"),
            vmem_limit_bytes=vmem_limit),
    )(x, w, b.reshape(1, N))


# ----------------------------------------------------------------------------
# Flash-attention kernel: grid (B, H, q-tile, kv-tile), kv innermost reduction
# ----------------------------------------------------------------------------
def _flash_kernel(q_ref, k_ref, v_ref, o_ref, m_ref, l_ref, acc_ref, *, scale):
    # q_ref: (tq, hd)   k_ref/v_ref: (tk, hd)   o_ref: (tq, hd)
    qi = pl.program_id(2)
    ki = pl.program_id(3)
    tq, hd = q_ref.shape
    tk = k_ref.shape[0]

    @pl.when(ki == 0)
    def _init():
        m_ref[...] = jnp.full(m_ref.shape, -jnp.inf, jnp.float32)
        l_ref[...] = jnp.zeros(l_ref.shape, jnp.float32)
        acc_ref[...] = jnp.zeros(acc_ref.shape, jnp.float32)

    def _accumulate(apply_mask):
        # Fold the 1/sqrt(C) scale into q (O(tq*hd) instead of O(tq*tk)).
        q = q_ref[...] * scale
        k = k_ref[...]
        v = v_ref[...]
        # q @ k^T -> (tq, tk), f32 accumulation on the MXU, no relayout.
        s = jax.lax.dot_general(q, k, (((1,), (1,)), ((), ())),
                                preferred_element_type=jnp.float32)
        if apply_mask:
            # Only diagonal blocks need the elementwise causal mask (tq == tk,
            # so relative row/col indices are exact on the diagonal block).
            row = jax.lax.broadcasted_iota(jnp.int32, (tq, tk), 0)
            col = jax.lax.broadcasted_iota(jnp.int32, (tq, tk), 1)
            s = jnp.where(row >= col, s, -1e30)

        m_prev = m_ref[...]
        m_new = jnp.maximum(m_prev, jnp.max(s, axis=-1, keepdims=True))
        alpha = jnp.exp(m_prev - m_new)
        p = jnp.exp(s - m_new)
        l_ref[...] = alpha * l_ref[...] + jnp.sum(p, axis=-1, keepdims=True)
        acc_ref[...] = alpha * acc_ref[...] + jax.lax.dot_general(
            p.astype(v.dtype), v, (((1,), (0,)), ((), ())),
            preferred_element_type=jnp.float32)
        m_ref[...] = m_new

    # Causal block skipping: kv tiles strictly above the diagonal are skipped
    # entirely (no QK^T, no exp, no PV work).
    @pl.when(ki < qi)
    def _off_diagonal():
        _accumulate(apply_mask=False)

    @pl.when(ki == qi)   # diagonal tile = last contributing kv tile for this q
    def _diagonal():
        _accumulate(apply_mask=True)
        # Single per-q-tile rescale by 1/l (folded, not per kv tile).
        o_ref[...] = (acc_ref[...] *
                      pl.reciprocal(l_ref[...], approx=False)).astype(o_ref.dtype)


def _flash_attention(q, k, v, *, scale, seq_tile=_SEQ_TILE):
    """q, k, v: (B, H, T, hd) -> (B, H, T, hd)."""
    B, H, T, hd = q.shape
    tq = _tile(T, seq_tile)
    tk = tq   # causal block-skip / diagonal-finalize logic assumes square tiles

    vmem_limit = _estimate_vmem(
        io_blocks=[((tq, hd), q.dtype), ((tk, hd), k.dtype),
                   ((tk, hd), v.dtype), ((tq, hd), q.dtype)],
        scratch_blocks=[((tq, 1), jnp.float32), ((tq, 1), jnp.float32),
                        ((tq, hd), jnp.float32)])

    kernel = functools.partial(_flash_kernel, scale=scale)
    # TODO(synk): for long-T configs, sweep pipeline_mode=pl.Buffered(3) on the
    # k/v specs (v7x: shorter bf16 compute per tile may expose the kv DMA).
    return pl.pallas_call(
        kernel,
        out_shape=jax.ShapeDtypeStruct((B, H, T, hd), q.dtype),
        grid_spec=pltpu.PrefetchScalarGridSpec(
            num_scalar_prefetch=0,
            grid=(B, H, T // tq, T // tk),
            in_specs=[
                # Leading B/H dims squeezed out of the kernel refs.
                pl.BlockSpec((None, None, tq, hd), lambda b, h, i, j: (b, h, i, 0)),
                pl.BlockSpec((None, None, tk, hd), lambda b, h, i, j: (b, h, j, 0)),
                pl.BlockSpec((None, None, tk, hd), lambda b, h, i, j: (b, h, j, 0)),
            ],
            out_specs=pl.BlockSpec((None, None, tq, hd),
                                   lambda b, h, i, j: (b, h, i, 0)),
            scratch_shapes=[
                pltpu.VMEM((tq, 1), jnp.float32),    # running max  m
                pltpu.VMEM((tq, 1), jnp.float32),    # running sum  l
                pltpu.VMEM((tq, hd), jnp.float32),   # output accumulator
            ],
        ),
        compiler_params=pltpu.CompilerParams(
            # B, H, q-tile all parallel (megacore sharding on v7x); kv is the
            # reduction axis and stays innermost / arbitrary.
            dimension_semantics=("parallel", "parallel", "parallel", "arbitrary"),
            vmem_limit_bytes=vmem_limit),
    )(q, k, v)


# ----------------------------------------------------------------------------
# Full forward pass
# ----------------------------------------------------------------------------
def causal_self_attention(x, w_attn, b_attn, w_proj, b_proj, *, n_head):
    """x: (B,T,C); w_attn: (C,3C); b_attn: (3C,); w_proj: (C,C); b_proj: (C,)."""
    B, T, C = x.shape
    assert C % n_head == 0
    hd = C // n_head

    # 1) QKV projection (tiled matmul + bias).
    qkv = _linear_bias(x.reshape(B * T, C), w_attn, b_attn)        # (B*T, 3C)

    # 2) Layout plumbing outside the kernels: (B*T,3C) -> 3 x (B, H, T, hd).
    qkv = qkv.reshape(B, T, 3, n_head, hd).transpose(2, 0, 3, 1, 4)
    q, k, v = qkv[0], qkv[1], qkv[2]

    # 3) Flash attention.  Scale is 1/sqrt(C) (full embed dim) to match the
    #    PyTorch module exactly.
    y = _flash_attention(q, k, v, scale=1.0 / math.sqrt(C))        # (B, H, T, hd)

    # 4) Merge heads (lane-dense C slab) and output projection.
    y = y.transpose(0, 2, 1, 3).reshape(B * T, C)
    out = _linear_bias(y, w_proj, b_proj)                          # (B*T, C)
    return out.reshape(B, T, C)


# TODO(synk): return_attn_weights=True path is not implemented -- the flash
# kernel never materializes the full (T, T) attention matrix by design.


def _reference(x, w_attn, b_attn, w_proj, b_proj, n_head):
    """Pure-JAX reference matching the PyTorch module semantics."""
    B, T, C = x.shape
    hd = C // n_head
    qkv = x @ w_attn + b_attn
    q, k, v = jnp.split(qkv, 3, axis=-1)
    q, k, v = [t.reshape(B, T, n_head, hd).transpose(0, 2, 1, 3)
               for t in (q, k, v)]
    att = (q @ k.transpose(0, 1, 3, 2)) / (C ** 0.5)
    mask = jnp.tril(jnp.ones((T, T)))
    att = jnp.where(mask[None, None] == 0, -jnp.inf, att)
    att = jax.nn.softmax(att, axis=-1)
    y = (att @ v).transpose(0, 2, 1, 3).reshape(B, T, C)
    return y @ w_proj + b_proj


if __name__ == "__main__":
    # Small config: B=2, T=8 (== block_size), C=n_embd=32, n_head=4.
    B, T, C, n_head = 2, 8, 32, 4

    key = jax.random.PRNGKey(0)
    kx, k1, k2, k3, k4 = jax.random.split(key, 5)
    x = jax.random.normal(kx, (B, T, C), dtype=jnp.float32)
    w_attn = jax.random.normal(k1, (C, 3 * C), dtype=jnp.float32) * 0.02
    b_attn = jax.random.normal(k2, (3 * C,), dtype=jnp.float32) * 0.02
    w_proj = jax.random.normal(k3, (C, C), dtype=jnp.float32) * 0.02
    b_proj = jax.random.normal(k4, (C,), dtype=jnp.float32) * 0.02

    fwd = jax.jit(functools.partial(causal_self_attention, n_head=n_head))
    out = jax.block_until_ready(fwd(x, w_attn, b_attn, w_proj, b_proj))

    ref = _reference(x, w_attn, b_attn, w_proj, b_proj, n_head)
    assert out.shape == (B, T, C)
    assert jnp.allclose(out, ref, atol=5e-5, rtol=5e-5), \
        f"max abs err = {jnp.max(jnp.abs(out - ref))}"

    print("KERNEL_OK")
</pallas_src>

<mosaic_0001>
module attributes {stable_mosaic.version = 11 : i64} {
  func.func @_matmul_bias_kernel(%arg0: i32, %arg1: i32, %arg2: i32, %arg3: memref<16x32xf32, #tpu.memory_space<vmem>>, %arg4: memref<32x96xf32, #tpu.memory_space<vmem>>, %arg5: memref<1x96xf32, #tpu.memory_space<vmem>>, %arg6: memref<16x96xf32, #tpu.memory_space<vmem>>, %arg7: memref<16x96xf32, #tpu.memory_space<vmem>>) attributes {dimension_semantics = [#tpu.dimension_semantics<parallel>, #tpu.dimension_semantics<parallel>, #tpu.dimension_semantics<arbitrary>], iteration_bounds = array<i64: 1, 1, 1>, scalar_prefetch = 0 : i64, scratch_operands = 1 : i64, tpu.core_type = #tpu.core_type<tc>, window_params = [{transform_indices = @transform_0, window_bounds = array<i64: 16, 32>}, {transform_indices = @transform_1, window_bounds = array<i64: 32, 96>}, {transform_indices = @transform_2, window_bounds = array<i64: 1, 96>}, {transform_indices = @transform_3, window_bounds = array<i64: 16, 96>}]} {
    %c0_i32 = arith.constant 0 : i32
    %0 = arith.cmpi eq, %arg2, %c0_i32 : i32
    %1 = arith.extui %0 : i1 to i32
    %c0_i32_0 = arith.constant 0 : i32
    %2 = arith.cmpi ne, %1, %c0_i32_0 : i32
    scf.if %2 {
      %cst_10 = arith.constant 0.000000e+00 : f32
      %12 = vector.broadcast %cst_10 : f32 to vector<16x96xf32>
      %c0_11 = arith.constant 0 : index
      %c0_12 = arith.constant 0 : index
      %13 = vector.load %arg7[%c0_11, %c0_12] : memref<16x96xf32, #tpu.memory_space<vmem>>, vector<16x96xf32>
      tpu.vector_store %arg7[%c0_11, %c0_12], %12 {strides = array<i32>} : memref<16x96xf32, #tpu.memory_space<vmem>>, vector<16x96xf32>,
    } else {
    }
    %c0 = arith.constant 0 : index
    %c0_1 = arith.constant 0 : index
    %3 = vector.load %arg7[%c0, %c0_1] : memref<16x96xf32, #tpu.memory_space<vmem>>, vector<16x96xf32>
    %c0_2 = arith.constant 0 : index
    %c0_3 = arith.constant 0 : index
    %4 = vector.load %arg3[%c0_2, %c0_3] : memref<16x32xf32, #tpu.memory_space<vmem>>, vector<16x32xf32>
    %c0_4 = arith.constant 0 : index
    %c0_5 = arith.constant 0 : index
    %5 = vector.load %arg4[%c0_4, %c0_5] : memref<32x96xf32, #tpu.memory_space<vmem>>, vector<32x96xf32>
    %cst = arith.constant dense<0.000000e+00> : vector<16x96xf32>
    %6 = tpu.matmul %4, %5, %cst {dimension_numbers = #tpu.dot_dimension_numbers<[1], [0], [0], [1], [0, 0, 1, 1], [], []>} : vector<16x32xf32>, vector<32x96xf32>, vector<16x96xf32> -> vector<16x96xf32>
    %7 = arith.addf %3, %6 : vector<16x96xf32>
    %c0_6 = arith.constant 0 : index
    %c0_7 = arith.constant 0 : index
    %8 = vector.load %arg7[%c0_6, %c0_7] : memref<16x96xf32, #tpu.memory_space<vmem>>, vector<16x96xf32>
    tpu.vector_store %arg7[%c0_6, %c0_7], %7 {strides = array<i32>} : memref<16x96xf32, #tpu.memory_space<vmem>>, vector<16x96xf32>,
    %c0_i32_8 = arith.constant 0 : i32
    %9 = arith.cmpi eq, %arg2, %c0_i32_8 : i32
    %10 = arith.extui %9 : i1 to i32
    %c0_i32_9 = arith.constant 0 : i32
    %11 = arith.cmpi ne, %10, %c0_i32_9 : i32
    scf.if %11 {
      %c0_10 = arith.constant 0 : index
      %c0_11 = arith.constant 0 : index
      %12 = vector.load %arg7[%c0_10, %c0_11] : memref<16x96xf32, #tpu.memory_space<vmem>>, vector<16x96xf32>
      %c0_12 = arith.constant 0 : index
      %c0_13 = arith.constant 0 : index
      %13 = vector.load %arg5[%c0_12, %c0_13] : memref<1x96xf32, #tpu.memory_space<vmem>>, vector<1x96xf32>
      %14 = vector.broadcast %13 : vector<1x96xf32> to vector<16x96xf32>
      %15 = arith.addf %12, %14 : vector<16x96xf32>
      %c0_14 = arith.constant 0 : index
      %c0_15 = arith.constant 0 : index
      %16 = vector.load %arg6[%c0_14, %c0_15] : memref<16x96xf32, #tpu.memory_space<vmem>>, vector<16x96xf32>
      tpu.vector_store %arg6[%c0_14, %c0_15], %15 {strides = array<i32>} : memref<16x96xf32, #tpu.memory_space<vmem>>, vector<16x96xf32>,
    } else {
    }
    return
  }
  func.func @transform_0(%arg0: i32, %arg1: i32, %arg2: i32) -> (i32, i32) {
    %c0_i32 = arith.constant 0 : i32
    return %arg0, %arg2 : i32, i32
  }
  func.func @transform_1(%arg0: i32, %arg1: i32, %arg2: i32) -> (i32, i32) {
    %c0_i32 = arith.constant 0 : i32
    return %arg2, %arg1 : i32, i32
  }
  func.func @transform_2(%arg0: i32, %arg1: i32, %arg2: i32) -> (i32, i32) {
    %c0_i32 = arith.constant 0 : i32
    %c0_i32_0 = arith.constant 0 : i32
    return %c0_i32, %arg1 : i32, i32
  }
  func.func @transform_3(%arg0: i32, %arg1: i32, %arg2: i32) -> (i32, i32) {
    %c0_i32 = arith.constant 0 : i32
    return %arg0, %arg1 : i32, i32
  }
}

module attributes {stable_mosaic.version = 11 : i64} {
  func.func @_flash_kernel(%arg0: i32, %arg1: i32, %arg2: i32, %arg3: i32, %arg4: memref<1x1x8x8xf32, #tpu.memory_space<vmem>>, %arg5: memref<1x1x8x8xf32, #tpu.memory_space<vmem>>, %arg6: memref<1x1x8x8xf32, #tpu.memory_space<vmem>>, %arg7: memref<1x1x8x8xf32, #tpu.memory_space<vmem>>, %arg8: memref<8x1xf32, #tpu.memory_space<vmem>>, %arg9: memref<8x1xf32, #tpu.memory_space<vmem>>, %arg10: memref<8x8xf32, #tpu.memory_space<vmem>>) attributes {dimension_semantics = [#tpu.dimension_semantics<parallel>, #tpu.dimension_semantics<parallel>, #tpu.dimension_semantics<parallel>, #tpu.dimension_semantics<arbitrary>], iteration_bounds = array<i64: 2, 4, 1, 1>, scalar_prefetch = 0 : i64, scratch_operands = 3 : i64, tpu.core_type = #tpu.core_type<tc>, window_params = [{transform_indices = @transform_0, window_bounds = array<i64: 1, 1, 8, 8>}, {transform_indices = @transform_1, window_bounds = array<i64: 1, 1, 8, 8>}, {transform_indices = @transform_2, window_bounds = array<i64: 1, 1, 8, 8>}, {transform_indices = @transform_3, window_bounds = array<i64: 1, 1, 8, 8>}]} {
    %c0_i32 = arith.constant 0 : i32
    %0 = arith.cmpi eq, %arg3, %c0_i32 : i32
    %1 = arith.extui %0 : i1 to i32
    %c0_i32_0 = arith.constant 0 : i32
    %2 = arith.cmpi ne, %1, %c0_i32_0 : i32
    scf.if %2 {
      %cst = arith.constant 0xFF800000 : f32
      %9 = vector.broadcast %cst : f32 to vector<8x1xf32>
      %c0 = arith.constant 0 : index
      %c0_3 = arith.constant 0 : index
      %10 = vector.load %arg8[%c0, %c0_3] : memref<8x1xf32, #tpu.memory_space<vmem>>, vector<8x1xf32>
      tpu.vector_store %arg8[%c0, %c0_3], %9 {strides = array<i32>} : memref<8x1xf32, #tpu.memory_space<vmem>>, vector<8x1xf32>,
      %cst_4 = arith.constant 0.000000e+00 : f32
      %11 = vector.broadcast %cst_4 : f32 to vector<8x1xf32>
      %c0_5 = arith.constant 0 : index
      %c0_6 = arith.constant 0 : index
      %12 = vector.load %arg9[%c0_5, %c0_6] : memref<8x1xf32, #tpu.memory_space<vmem>>, vector<8x1xf32>
      tpu.vector_store %arg9[%c0_5, %c0_6], %11 {strides = array<i32>} : memref<8x1xf32, #tpu.memory_space<vmem>>, vector<8x1xf32>,
      %cst_7 = arith.constant 0.000000e+00 : f32
      %13 = vector.broadcast %cst_7 : f32 to vector<8x8xf32>
      %c0_8 = arith.constant 0 : index
      %c0_9 = arith.constant 0 : index
      %14 = vector.load %arg10[%c0_8, %c0_9] : memref<8x8xf32, #tpu.memory_space<vmem>>, vector<8x8xf32>
      tpu.vector_store %arg10[%c0_8, %c0_9], %13 {strides = array<i32>} : memref<8x8xf32, #tpu.memory_space<vmem>>, vector<8x8xf32>,
    } else {
    }
    %3 = arith.cmpi slt, %arg3, %arg2 : i32
    %4 = arith.extui %3 : i1 to i32
    %c0_i32_1 = arith.constant 0 : i32
    %5 = arith.cmpi ne, %4, %c0_i32_1 : i32
    scf.if %5 {
      %c0 = arith.constant 0 : index
      %c0_3 = arith.constant 0 : index
      %c0_4 = arith.constant 0 : index
      %c0_5 = arith.constant 0 : index
      %9 = vector.load %arg4[%c0, %c0_3, %c0_4, %c0_5] : memref<1x1x8x8xf32, #tpu.memory_space<vmem>>, vector<1x1x8x8xf32>
      %10 = vector.shape_cast %9 : vector<1x1x8x8xf32> to vector<8x8xf32>
      %cst = arith.constant 0.176776692 : f32
      %11 = vector.broadcast %cst : f32 to vector<8x8xf32>
      %12 = arith.mulf %10, %11 : vector<8x8xf32>
      %c0_6 = arith.constant 0 : index
      %c0_7 = arith.constant 0 : index
      %c0_8 = arith.constant 0 : index
      %c0_9 = arith.constant 0 : index
      %13 = vector.load %arg5[%c0_6, %c0_7, %c0_8, %c0_9] : memref<1x1x8x8xf32, #tpu.memory_space<vmem>>, vector<1x1x8x8xf32>
      %14 = vector.shape_cast %13 : vector<1x1x8x8xf32> to vector<8x8xf32>
      %c0_10 = arith.constant 0 : index
      %c0_11 = arith.constant 0 : index
      %c0_12 = arith.constant 0 : index
      %c0_13 = arith.constant 0 : index
      %15 = vector.load %arg6[%c0_10, %c0_11, %c0_12, %c0_13] : memref<1x1x8x8xf32, #tpu.memory_space<vmem>>, vector<1x1x8x8xf32>
      %16 = vector.shape_cast %15 : vector<1x1x8x8xf32> to vector<8x8xf32>
      %cst_14 = arith.constant dense<0.000000e+00> : vector<8x8xf32>
      %17 = tpu.matmul %12, %14, %cst_14 {dimension_numbers = #tpu.dot_dimension_numbers<[1], [1], [0], [0], [0, 0, 1, 0], [], []>} : vector<8x8xf32>, vector<8x8xf32>, vector<8x8xf32> -> vector<8x8xf32>
      %c0_15 = arith.constant 0 : index
      %c0_16 = arith.constant 0 : index
      %18 = vector.load %arg8[%c0_15, %c0_16] : memref<8x1xf32, #tpu.memory_space<vmem>>, vector<8x1xf32>
      %cst_17 = arith.constant dense<0xFF800000> : vector<8xf32>
      %19 = vector.multi_reduction <maximumf>, %17, %cst_17 [1] : vector<8x8xf32> to vector<8xf32>
      %20 = vector.shape_cast %19 : vector<8xf32> to vector<8x1xf32>
      %21 = arith.maximumf %18, %20 : vector<8x1xf32>
      %22 = arith.subf %18, %21 : vector<8x1xf32>
      %23 = math.exp %22 : vector<8x1xf32>
      %24 = vector.broadcast %21 : vector<8x1xf32> to vector<8x8xf32>
      %25 = arith.subf %17, %24 : vector<8x8xf32>
      %26 = math.exp %25 : vector<8x8xf32>
      %c0_18 = arith.constant 0 : index
      %c0_19 = arith.constant 0 : index
      %27 = vector.load %arg9[%c0_18, %c0_19] : memref<8x1xf32, #tpu.memory_space<vmem>>, vector<8x1xf32>
      %28 = arith.mulf %23, %27 : vector<8x1xf32>
      %cst_20 = arith.constant dense<0.000000e+00> : vector<8xf32>
      %29 = vector.multi_reduction <add>, %26, %cst_20 [1] : vector<8x8xf32> to vector<8xf32>
      %30 = vector.shape_cast %29 : vector<8xf32> to vector<8x1xf32>
      %31 = arith.addf %28, %30 : vector<8x1xf32>
      %c0_21 = arith.constant 0 : index
      %c0_22 = arith.constant 0 : index
      %32 = vector.load %arg9[%c0_21, %c0_22] : memref<8x1xf32, #tpu.memory_space<vmem>>, vector<8x1xf32>
      tpu.vector_store %arg9[%c0_21, %c0_22], %31 {strides = array<i32>} : memref<8x1xf32, #tpu.memory_space<vmem>>, vector<8x1xf32>,
      %c0_23 = arith.constant 0 : index
      %c0_24 = arith.constant 0 : index
      %33 = vector.load %arg10[%c0_23, %c0_24] : memref<8x8xf32, #tpu.memory_space<vmem>>, vector<8x8xf32>
      %34 = vector.broadcast %23 : vector<8x1xf32> to vector<8x8xf32>
      %35 = arith.mulf %34, %33 : vector<8x8xf32>
      %cst_25 = arith.constant dense<0.000000e+00> : vector<8x8xf32>
      %36 = tpu.matmul %26, %16, %cst_25 {dimension_numbers = #tpu.dot_dimension_numbers<[1], [0], [0], [1], [0, 0, 1, 1], [], []>} : vector<8x8xf32>, vector<8x8xf32>, vector<8x8xf32> -> vector<8x8xf32>
      %37 = arith.addf %35, %36 : vector<8x8xf32>
      %c0_26 = arith.constant 0 : index
      %c0_27 = arith.constant 0 : index
      %38 = vector.load %arg10[%c0_26, %c0_27] : memref<8x8xf32, #tpu.memory_space<vmem>>, vector<8x8xf32>
      tpu.vector_store %arg10[%c0_26, %c0_27], %37 {strides = array<i32>} : memref<8x8xf32, #tpu.memory_space<vmem>>, vector<8x8xf32>,
      %c0_28 = arith.constant 0 : index
      %c0_29 = arith.constant 0 : index
      %39 = vector.load %arg8[%c0_28, %c0_29] : memref<8x1xf32, #tpu.memory_space<vmem>>, vector<8x1xf32>
      tpu.vector_store %arg8[%c0_28, %c0_29], %21 {strides = array<i32>} : memref<8x1xf32, #tpu.memory_space<vmem>>, vector<8x1xf32>,
    } else {
    }
    %6 = arith.cmpi eq, %arg3, %arg2 : i32
    %7 = arith.extui %6 : i1 to i32
    %c0_i32_2 = arith.constant 0 : i32
    %8 = arith.cmpi ne, %7, %c0_i32_2 : i32
    scf.if %8 {
      %c0 = arith.constant 0 : index
      %c0_3 = arith.constant 0 : index
      %c0_4 = arith.constant 0 : index
      %c0_5 = arith.constant 0 : index
      %9 = vector.load %arg4[%c0, %c0_3, %c0_4, %c0_5] : memref<1x1x8x8xf32, #tpu.memory_space<vmem>>, vector<1x1x8x8xf32>
      %10 = vector.shape_cast %9 : vector<1x1x8x8xf32> to vector<8x8xf32>
      %cst = arith.constant 0.176776692 : f32
      %11 = vector.broadcast %cst : f32 to vector<8x8xf32>
      %12 = arith.mulf %10, %11 : vector<8x8xf32>
      %c0_6 = arith.constant 0 : index
      %c0_7 = arith.constant 0 : index
      %c0_8 = arith.constant 0 : index
      %c0_9 = arith.constant 0 : index
      %13 = vector.load %arg5[%c0_6, %c0_7, %c0_8, %c0_9] : memref<1x1x8x8xf32, #tpu.memory_space<vmem>>, vector<1x1x8x8xf32>
      %14 = vector.shape_cast %13 : vector<1x1x8x8xf32> to vector<8x8xf32>
      %c0_10 = arith.constant 0 : index
      %c0_11 = arith.constant 0 : index
      %c0_12 = arith.constant 0 : index
      %c0_13 = arith.constant 0 : index
      %15 = vector.load %arg6[%c0_10, %c0_11, %c0_12, %c0_13] : memref<1x1x8x8xf32, #tpu.memory_space<vmem>>, vector<1x1x8x8xf32>
      %16 = vector.shape_cast %15 : vector<1x1x8x8xf32> to vector<8x8xf32>
      %cst_14 = arith.constant dense<0.000000e+00> : vector<8x8xf32>
      %17 = tpu.matmul %12, %14, %cst_14 {dimension_numbers = #tpu.dot_dimension_numbers<[1], [1], [0], [0], [0, 0, 1, 0], [], []>} : vector<8x8xf32>, vector<8x8xf32>, vector<8x8xf32> -> vector<8x8xf32>
      %18 = tpu.iota {dimensions = array<i32: 0>} : vector<8x8xi32>
      %19 = tpu.iota {dimensions = array<i32: 1>} : vector<8x8xi32>
      %20 = arith.cmpi sge, %18, %19 : vector<8x8xi32>
      %cst_15 = arith.constant -1.000000e+30 : f32
      %21 = vector.broadcast %cst_15 : f32 to vector<8x8xf32>
      %22 = arith.select %20, %17, %21 : vector<8x8xi1>, vector<8x8xf32>
      %c0_16 = arith.constant 0 : index
      %c0_17 = arith.constant 0 : index
      %23 = vector.load %arg8[%c0_16, %c0_17] : memref<8x1xf32, #tpu.memory_space<vmem>>, vector<8x1xf32>
      %cst_18 = arith.constant dense<0xFF800000> : vector<8xf32>
      %24 = vector.multi_reduction <maximumf>, %22, %cst_18 [1] : vector<8x8xf32> to vector<8xf32>
      %25 = vector.shape_cast %24 : vector<8xf32> to vector<8x1xf32>
      %26 = arith.maximumf %23, %25 : vector<8x1xf32>
      %27 = arith.subf %23, %26 : vector<8x1xf32>
      %28 = math.exp %27 : vector<8x1xf32>
      %29 = vector.broadcast %26 : vector<8x1xf32> to vector<8x8xf32>
      %30 = arith.subf %22, %29 : vector<8x8xf32>
      %31 = math.exp %30 : vector<8x8xf32>
      %c0_19 = arith.constant 0 : index
      %c0_20 = arith.constant 0 : index
      %32 = vector.load %arg9[%c0_19, %c0_20] : memref<8x1xf32, #tpu.memory_space<vmem>>, vector<8x1xf32>
      %33 = arith.mulf %28, %32 : vector<8x1xf32>
      %cst_21 = arith.constant dense<0.000000e+00> : vector<8xf32>
      %34 = vector.multi_reduction <add>, %31, %cst_21 [1] : vector<8x8xf32> to vector<8xf32>
      %35 = vector.shape_cast %34 : vector<8xf32> to vector<8x1xf32>
      %36 = arith.addf %33, %35 : vector<8x1xf32>
      %c0_22 = arith.constant 0 : index
      %c0_23 = arith.constant 0 : index
      %37 = vector.load %arg9[%c0_22, %c0_23] : memref<8x1xf32, #tpu.memory_space<vmem>>, vector<8x1xf32>
      tpu.vector_store %arg9[%c0_22, %c0_23], %36 {strides = array<i32>} : memref<8x1xf32, #tpu.memory_space<vmem>>, vector<8x1xf32>,
      %c0_24 = arith.constant 0 : index
      %c0_25 = arith.constant 0 : index
      %38 = vector.load %arg10[%c0_24, %c0_25] : memref<8x8xf32, #tpu.memory_space<vmem>>, vector<8x8xf32>
      %39 = vector.broadcast %28 : vector<8x1xf32> to vector<8x8xf32>
      %40 = arith.mulf %39, %38 : vector<8x8xf32>
      %cst_26 = arith.constant dense<0.000000e+00> : vector<8x8xf32>
      %41 = tpu.matmul %31, %16, %cst_26 {dimension_numbers = #tpu.dot_dimension_numbers<[1], [0], [0], [1], [0, 0, 1, 1], [], []>} : vector<8x8xf32>, vector<8x8xf32>, vector<8x8xf32> -> vector<8x8xf32>
      %42 = arith.addf %40, %41 : vector<8x8xf32>
      %c0_27 = arith.constant 0 : index
      %c0_28 = arith.constant 0 : index
      %43 = vector.load %arg10[%c0_27, %c0_28] : memref<8x8xf32, #tpu.memory_space<vmem>>, vector<8x8xf32>
      tpu.vector_store %arg10[%c0_27, %c0_28], %42 {strides = array<i32>} : memref<8x8xf32, #tpu.memory_space<vmem>>, vector<8x8xf32>,
      %c0_29 = arith.constant 0 : index
      %c0_30 = arith.constant 0 : index
      %44 = vector.load %arg8[%c0_29, %c0_30] : memref<8x1xf32, #tpu.memory_space<vmem>>, vector<8x1xf32>
      tpu.vector_store %arg8[%c0_29, %c0_30], %26 {strides = array<i32>} : memref<8x1xf32, #tpu.memory_space<vmem>>, vector<8x1xf32>,
      %c0_31 = arith.constant 0 : index
      %c0_32 = arith.constant 0 : index
      %45 = vector.load %arg10[%c0_31, %c0_32] : memref<8x8xf32, #tpu.memory_space<vmem>>, vector<8x8xf32>
      %c0_33 = arith.constant 0 : index
      %c0_34 = arith.constant 0 : index
      %46 = vector.load %arg9[%c0_33, %c0_34] : memref<8x1xf32, #tpu.memory_space<vmem>>, vector<8x1xf32>
      %47 = tpu.reciprocal %46 : vector<8x1xf32> -> vector<8x1xf32>
      %48 = vector.broadcast %47 : vector<8x1xf32> to vector<8x8xf32>
      %49 = arith.mulf %45, %48 : vector<8x8xf32>
      %c0_35 = arith.constant 0 : index
      %c0_36 = arith.constant 0 : index
      %c0_37 = arith.constant 0 : index
      %c0_38 = arith.constant 0 : index
      %50 = vector.load %arg7[%c0_35, %c0_36, %c0_37, %c0_38] : memref<1x1x8x8xf32, #tpu.memory_space<vmem>>, vector<1x1x8x8xf32>
      %51 = vector.shape_cast %50 : vector<1x1x8x8xf32> to vector<8x8xf32>
      %52 = vector.shape_cast %49 : vector<8x8xf32> to vector<1x1x8x8xf32>
      tpu.vector_store %arg7[%c0_35, %c0_36, %c0_37, %c0_38], %52 {strides = array<i32>} : memref<1x1x8x8xf32, #tpu.memory_space<vmem>>, vector<1x1x8x8xf32>,
    } else {
    }
    return
  }
  func.func @transform_0(%arg0: i32, %arg1: i32, %arg2: i32, %arg3: i32) -> (i32, i32, i32, i32) {
    %c0_i32 = arith.constant 0 : i32
    %c0_i32_0 = arith.constant 0 : i32
    return %arg0, %arg1, %arg2, %c0_i32 : i32, i32, i32, i32
  }
  func.func @transform_1(%arg0: i32, %arg1: i32, %arg2: i32, %arg3: i32) -> (i32, i32, i32, i32) {
    %c0_i32 = arith.constant 0 : i32
    %c0_i32_0 = arith.constant 0 : i32
    return %arg0, %arg1, %arg3, %c0_i32 : i32, i32, i32, i32
  }
  func.func @transform_2(%arg0: i32, %arg1: i32, %arg2: i32, %arg3: i32) -> (i32, i32, i32, i32) {
    %c0_i32 = arith.constant 0 : i32
    %c0_i32_0 = arith.constant 0 : i32
    return %arg0, %arg1, %arg3, %c0_i32 : i32, i32, i32, i32
  }
  func.func @transform_3(%arg0: i32, %arg1: i32, %arg2: i32, %arg3: i32) -> (i32, i32, i32, i32) {
    %c0_i32 = arith.constant 0 : i32
    %c0_i32_0 = arith.constant 0 : i32
    return %arg0, %arg1, %arg2, %c0_i32 : i32, i32, i32, i32
  }
}

module attributes {stable_mosaic.version = 11 : i64} {
  func.func @_matmul_bias_kernel(%arg0: i32, %arg1: i32, %arg2: i32, %arg3: memref<16x32xf32, #tpu.memory_space<vmem>>, %arg4: memref<32x32xf32, #tpu.memory_space<vmem>>, %arg5: memref<1x32xf32, #tpu.memory_space<vmem>>, %arg6: memref<16x32xf32, #tpu.memory_space<vmem>>, %arg7: memref<16x32xf32, #tpu.memory_space<vmem>>) attributes {dimension_semantics = [#tpu.dimension_semantics<parallel>, #tpu.dimension_semantics<parallel>, #tpu.dimension_semantics<arbitrary>], iteration_bounds = array<i64: 1, 1, 1>, scalar_prefetch = 0 : i64, scratch_operands = 1 : i64, tpu.core_type = #tpu.core_type<tc>, window_params = [{transform_indices = @transform_0, window_bounds = array<i64: 16, 32>}, {transform_indices = @transform_1, window_bounds = array<i64: 32, 32>}, {transform_indices = @transform_2, window_bounds = array<i64: 1, 32>}, {transform_indices = @transform_3, window_bounds = array<i64: 16, 32>}]} {
    %c0_i32 = arith.constant 0 : i32
    %0 = arith.cmpi eq, %arg2, %c0_i32 : i32
    %1 = arith.extui %0 : i1 to i32
    %c0_i32_0 = arith.constant 0 : i32
    %2 = arith.cmpi ne, %1, %c0_i32_0 : i32
    scf.if %2 {
      %cst_10 = arith.constant 0.000000e+00 : f32
      %12 = vector.broadcast %cst_10 : f32 to vector<16x32xf32>
      %c0_11 = arith.constant 0 : index
      %c0_12 = arith.constant 0 : index
      %13 = vector.load %arg7[%c0_11, %c0_12] : memref<16x32xf32, #tpu.memory_space<vmem>>, vector<16x32xf32>
      tpu.vector_store %arg7[%c0_11, %c0_12], %12 {strides = array<i32>} : memref<16x32xf32, #tpu.memory_space<vmem>>, vector<16x32xf32>,
    } else {
    }
    %c0 = arith.constant 0 : index
    %c0_1 = arith.constant 0 : index
    %3 = vector.load %arg7[%c0, %c0_1] : memref<16x32xf32, #tpu.memory_space<vmem>>, vector<16x32xf32>
    %c0_2 = arith.constant 0 : index
    %c0_3 = arith.constant 0 : index
    %4 = vector.load %arg3[%c0_2, %c0_3] : memref<16x32xf32, #tpu.memory_space<vmem>>, vector<16x32xf32>
    %c0_4 = arith.constant 0 : index
    %c0_5 = arith.constant 0 : index
    %5 = vector.load %arg4[%c0_4, %c0_5] : memref<32x32xf32, #tpu.memory_space<vmem>>, vector<32x32xf32>
    %cst = arith.constant dense<0.000000e+00> : vector<16x32xf32>
    %6 = tpu.matmul %4, %5, %cst {dimension_numbers = #tpu.dot_dimension_numbers<[1], [0], [0], [1], [0, 0, 1, 1], [], []>} : vector<16x32xf32>, vector<32x32xf32>, vector<16x32xf32> -> vector<16x32xf32>
    %7 = arith.addf %3, %6 : vector<16x32xf32>
    %c0_6 = arith.constant 0 : index
    %c0_7 = arith.constant 0 : index
    %8 = vector.load %arg7[%c0_6, %c0_7] : memref<16x32xf32, #tpu.memory_space<vmem>>, vector<16x32xf32>
    tpu.vector_store %arg7[%c0_6, %c0_7], %7 {strides = array<i32>} : memref<16x32xf32, #tpu.memory_space<vmem>>, vector<16x32xf32>,
    %c0_i32_8 = arith.constant 0 : i32
    %9 = arith.cmpi eq, %arg2, %c0_i32_8 : i32
    %10 = arith.extui %9 : i1 to i32
    %c0_i32_9 = arith.constant 0 : i32
    %11 = arith.cmpi ne, %10, %c0_i32_9 : i32
    scf.if %11 {
      %c0_10 = arith.constant 0 : index
      %c0_11 = arith.constant 0 : index
      %12 = vector.load %arg7[%c0_10, %c0_11] : memref<16x32xf32, #tpu.memory_space<vmem>>, vector<16x32xf32>
      %c0_12 = arith.constant 0 : index
      %c0_13 = arith.constant 0 : index
      %13 = vector.load %arg5[%c0_12, %c0_13] : memref<1x32xf32, #tpu.memory_space<vmem>>, vector<1x32xf32>
      %14 = vector.broadcast %13 : vector<1x32xf32> to vector<16x32xf32>
      %15 = arith.addf %12, %14 : vector<16x32xf32>
      %c0_14 = arith.constant 0 : index
      %c0_15 = arith.constant 0 : index
      %16 = vector.load %arg6[%c0_14, %c0_15] : memref<16x32xf32, #tpu.memory_space<vmem>>, vector<16x32xf32>
      tpu.vector_store %arg6[%c0_14, %c0_15], %15 {strides = array<i32>} : memref<16x32xf32, #tpu.memory_space<vmem>>, vector<16x32xf32>,
    } else {
    }
    return
  }
  func.func @transform_0(%arg0: i32, %arg1: i32, %arg2: i32) -> (i32, i32) {
    %c0_i32 = arith.constant 0 : i32
    return %arg0, %arg2 : i32, i32
  }
  func.func @transform_1(%arg0: i32, %arg1: i32, %arg2: i32) -> (i32, i32) {
    %c0_i32 = arith.constant 0 : i32
    return %arg2, %arg1 : i32, i32
  }
  func.func @transform_2(%arg0: i32, %arg1: i32, %arg2: i32) -> (i32, i32) {
    %c0_i32 = arith.constant 0 : i32
    %c0_i32_0 = arith.constant 0 : i32
    return %c0_i32, %arg1 : i32, i32
  }
  func.func @transform_3(%arg0: i32, %arg1: i32, %arg2: i32) -> (i32, i32) {
    %c0_i32 = arith.constant 0 : i32
    return %arg0, %arg1 : i32, i32
  }
}

</mosaic_0001>

<llo_original>
// kernel: causal_self_attention.3
$region0: #{causal_self_attention.3}
  #allocation0 [shape = 'u32[]', space=smem, size = 0x4, offset = 0x4, fixed_abs, tag = 'smem constant byte address 0x4 - core index']
  #allocation1 [shape = 'u32[144,128]{1,0:T(1,128)}', space=vmem, size = 0x12000, scoped, tag = 'internal scratch']
  #allocation2 [shape = 'f32[16,96]{1,0:T(8,128)}', space=vmem, size = 0x2000, scoped, tag = 'scratch operand']
  %s0 = inlined_call_operand.hbm [shape: f32[16,32], index: 0, kind: input, shape index: {}]
  %s1 = inlined_call_operand.hbm [shape: f32[32,96], index: 1, kind: input, shape index: {}]
  %s2 = inlined_call_operand.vmem [shape: f32[1,96], index: 2, kind: input, shape index: {}]
  %s3 = inlined_call_operand.vmem [shape: f32[16,96], index: 3, kind: output, shape index: {}]
  %s4 = sld [smem:[#allocation0]]
  $region38: #{causal_self_attention.3} parent=0
    _
  %s6 = ssub.s32 1, %s4
  %s7 = scalar_select 0, %s6, %s4
  $region1: #{causal_self_attention.3} parent=0
    #allocation3 [shape = 'u8[8192]{0}', space=vmem, size = 0x2000, scoped, tag = 'input window, operand 0, single buffered']
    #allocation4 [shape = 's32[1]{0}', space=sflag, size = 0x4, scoped, tag = 'scoped memory for causal_self_attention.3']
    #allocation5 [shape = 'u8[16384]{0}', space=vmem, size = 0x4000, scoped, tag = 'input window, operand 1, single buffered']
    #allocation6 [shape = 's32[1]{0}', space=sflag, size = 0x4, scoped, tag = 'scoped memory for causal_self_attention.3']
    %8 = vsyncpa [#allocation4], 0
    %9 = vsyncpa [#allocation6], 0
    // Predicated region
    $region2: #{causal_self_attention.3} parent=1 // pred_check
      _
    $region3: #{causal_self_attention.3} parent=1 // pred_check_branch
      %11 = sbr.rel (0) target = $region5
    $region4: #{causal_self_attention.3} parent=1 // pred_region
      %s13 = ssub.s32 256, 256
      %14 = vsyncadd [#allocation4], %s13
      %s15 = sshll.u32 [#allocation3], 4
      %s16 = int_to_ptr.vmem [resolvable:$true] %s15
      %21 = dma.hbm_to_vmem [thread:$0]  %s0, 256, %s16, [#allocation4], 128, 128, 8
    $region5: #{causal_self_attention.3} parent=1 // pred_fallthru
      _
    // Predicated region
    $region6: #{causal_self_attention.3} parent=1 // pred_check
      _
    $region7: #{causal_self_attention.3} parent=1 // pred_check_branch
      %23 = sbr.rel (0) target = $region9
    $region8: #{causal_self_attention.3} parent=1 // pred_region
      %s25 = ssub.s32 512, 512
      %26 = vsyncadd [#allocation6], %s25
      %s27 = sshll.u32 [#allocation5], 4
      %s28 = int_to_ptr.vmem [resolvable:$true] %s27
      %33 = dma.hbm_to_vmem [thread:$0]  %s1, 512, %s28, [#allocation6], 128, 128, 8
    $region9: #{causal_self_attention.3} parent=1 // pred_fallthru
      _
    // Predicated region
    $region10: #{causal_self_attention.3} parent=1 // pred_check
      _
    $region11: #{causal_self_attention.3} parent=1 // pred_check_branch
      %35 = sbr.rel (0) target = $region13
    $region12: #{causal_self_attention.3} parent=1 // pred_region
      _
    $region13: #{causal_self_attention.3} parent=1 // pred_fallthru
      _
    // Predicated region
    $region14: #{causal_self_attention.3} parent=1 // pred_check
      _
    $region15: #{causal_self_attention.3} parent=1 // pred_check_branch
      %37 = sbr.rel (0) target = $region17
    $region16: #{causal_self_attention.3} parent=1 // pred_region
      %38 = dma.done [#allocation4], 256
    $region17: #{causal_self_attention.3} parent=1 // pred_fallthru
      _
    // Predicated region
    $region18: #{causal_self_attention.3} parent=1 // pred_check
      _
    $region19: #{causal_self_attention.3} parent=1 // pred_check_branch
      %40 = sbr.rel (0) target = $region21
    $region20: #{causal_self_attention.3} parent=1 // pred_region
      %41 = dma.done [#allocation6], 512
    $region21: #{causal_self_attention.3} parent=1 // pred_fallthru
      _
    %p42 = scmp.eq.s32.totalorder 0, 0
    // Predicated region
    $region22: #{causal_self_attention.3} parent=1 // pred_check
      %p43 = pneg %p42
    $region23: #{causal_self_attention.3} parent=1 // pred_check_branch
      %45 = sbr.rel (%p43) target = $region25
    $region24: #{causal_self_attention.3} parent=1 // pred_region
      %vm46 = vcmask 785408
      %47 = vst.msk [vmem:[#allocation2] sm:$0xff] %vm46, 0.0
      %48 = vst.msk [vmem:[#allocation2 + $0x8] sm:$0xff] %vm46, 0.0
    $region25: #{causal_self_attention.3} parent=1 // pred_fallthru
      _
    %v49 = vld [vmem:[#allocation2] sm:$0xff]
    %v50 = vld [vmem:[#allocation2 + $0x8] sm:$0xff]
    %v51 = vld [vmem:[#allocation3] sm:$0xff]
    %v52 = vld [vmem:[#allocation3 + $0x8] sm:$0xff]
    %v53 = vld [vmem:[#allocation5] sm:$0xff]
    %v54 = vld [vmem:[#allocation5 + $0x8] sm:$0xff]
    %v55 = vld [vmem:[#allocation5 + $0x10] sm:$0xff]
    %v56 = vld [vmem:[#allocation5 + $0x18] sm:$0xff]
    %vm57 = vcmask 261120
    %v59 = vsel %vm57, %v51, 0
    %v62 = vsel %vm57, %v52, 0
    %64 = vmatprep.subr.mxu0 0.0
    %65 = vmatpush1.msra.mxu0 %v53
    %66 = vmatprep.subr.mxu0 0.0
    %67 = vmatpush1.msra.mxu0 %v54
    %68 = vmatprep.subr.mxu0 0.0
    %69 = vmatpush1.msra.mxu0 %v55
    %70 = vmatprep.subr.mxu0 0.0
    %71 = vmatpush1.msra.mxu0 %v56
    %72 = vmatprep.subr.mxu0 0.0
    %73 = vmatpush1.msra.mxu0 0.0
    %74 = vmatprep.subr.mxu0 0.0
    %75 = vmatpush1.msra.mxu0 0.0
    %76 = vmatprep.subr.mxu0 0.0
    %77 = vmatpush1.msra.mxu0 0.0
    %78 = vmatprep.subr.mxu0 0.0
    %79 = vmatpush1.msra.mxu0 0.0
    %80 = vmatprep.subr.mxu0 0.0
    %81 = vmatpush1.msra.mxu0 0.0
    %82 = vmatprep.subr.mxu0 0.0
    %83 = vmatpush1.msra.mxu0 0.0
    %84 = vmatprep.subr.mxu0 0.0
    %85 = vmatpush1.msra.mxu0 0.0
    %86 = vmatprep.subr.mxu0 0.0
    %87 = vmatpush1.msra.mxu0 0.0
    %88 = vmatprep.subr.mxu0 0.0
    %89 = vmatpush1.msra.mxu0 0.0
    %90 = vmatprep.subr.mxu0 0.0
    %91 = vmatpush1.msra.mxu0 0.0
    %92 = vmatprep.subr.mxu0 0.0
    %93 = vmatpush1.msra.mxu0 0.0
    %94 = vmatprep.subr.mxu0 0.0
    %95 = vmatpush1.msra.mxu0 0.0
    %96 = vmatprep.subr.mxu0 0.0
    %97 = vmatpush1.msra.mxu0 0.0
    %98 = vmatprep.subr.mxu0 0.0
    %99 = vmatpush1.msra.mxu0 0.0
    %100 = vmatprep.subr.mxu0 0.0
    %101 = vmatpush1.msra.mxu0 0.0
    %102 = vmatprep.subr.mxu0 0.0
    %103 = vmatpush1.msra.mxu0 0.0
    %104 = vmatprep.subr.mxu0 0.0
    %105 = vmatpush1.msra.mxu0 0.0
    %106 = vmatprep.subr.mxu0 0.0
    %107 = vmatpush1.msra.mxu0 0.0
    %108 = vmatprep.subr.mxu0 0.0
    %109 = vmatpush1.msra.mxu0 0.0
    %110 = vmatprep.subr.mxu0 0.0
    %111 = vmatpush1.msra.mxu0 0.0
    %112 = vmatprep.subr.mxu0 0.0
    %113 = vmatpush1.msra.mxu0 0.0
    %114 = vmatprep.subr.mxu0 0.0
    %115 = vmatpush1.msra.mxu0 0.0
    %116 = vmatprep.subr.mxu0 0.0
    %117 = vmatpush1.msra.mxu0 0.0
    %118 = vmatprep.subr.mxu0 0.0
    %119 = vmatpush1.msra.mxu0 0.0
    %120 = vmatprep.subr.mxu0 0.0
    %121 = vmatpush1.msra.mxu0 0.0
    %122 = vmatprep.subr.mxu0 0.0
    %123 = vmatpush1.msra.mxu0 0.0
    %124 = vmatprep.subr.mxu0 0.0
    %125 = vmatpush1.msra.mxu0 0.0
    %126 = vmatprep.subr.mxu0 0.0
    %127 = vmatpush1.msra.mxu0 0.0
    %128 = vmatprep.mubr.f32.mxu0 0.0
    %129 = vmatmul.mubr.f32.gmra.mrb[0].mxu0 %v59
    %v130 = vpop.f32.mrb[0].mxu0
    %v131 = vadd.f32 0.0, %v130
    %v132 = vpop.f32.mrb[0].mxu0
    %133 = vmatprep.mubr.f32.mxu0 0.0
    %134 = vmatmul.mubr.f32.gmra.mrb[0].mxu0 %v62
    %v135 = vpop.f32.mrb[0].mxu0
    %v136 = vadd.f32 0.0, %v135
    %v137 = vpop.f32.mrb[0].mxu0
    %138 = vdwg.mxu0
    %v139 = vadd.f32 %v49, %v131
    %v140 = vadd.f32 %v50, %v136
    %vm141 = vcmask 785408
    %142 = vst.msk [vmem:[#allocation2] sm:$0xff] %vm141, %v139
    %143 = vst.msk [vmem:[#allocation2 + $0x8] sm:$0xff] %vm141, %v140
    // Predicated region
    $region26: #{causal_self_attention.3} parent=1 // pred_check
      %p144 = pneg %p42
    $region27: #{causal_self_attention.3} parent=1 // pred_check_branch
      %146 = sbr.rel (%p144) target = $region29
    $region28: #{causal_self_attention.3} parent=1 // pred_region
      %v147 = vld [vmem:[#allocation2] sm:$0xff]
      %v148 = vld [vmem:[#allocation2 + $0x8] sm:$0xff]
      %v149 = vld [vmem:[%s2] sm:$0x1]
      %v151 = vlaneseq
      %v152 = vshrl.u32 %v151, 7
      %v153 = vsub.s32 0, %v152
      %v154 = vrot.slane %v149, %v153
      %v156 = vadd.f32 %v147, %v154
      %v157 = vadd.f32 %v148, %v154
      %158 = vst.msk [vmem:[%s3] sm:$0xff] %vm141, %v156
      %159 = vst.msk [vmem:[%s3 + $0x8] sm:$0xff] %vm141, %v157
    $region29: #{causal_self_attention.3} parent=1 // pred_fallthru
      _
    // Predicated region
    $region30: #{causal_self_attention.3} parent=1 // pred_check
      _
    $region31: #{causal_self_attention.3} parent=1 // pred_check_branch
      %161 = sbr.rel (0) target = $region33
    $region32: #{causal_self_attention.3} parent=1 // pred_region
      _
    $region33: #{causal_self_attention.3} parent=1 // pred_fallthru
      _
    // Predicated region
    $region34: #{causal_self_attention.3} parent=1 // pred_check
      _
    $region35: #{causal_self_attention.3} parent=1 // pred_check_branch
      %163 = sbr.rel (0) target = $region37
    $region36: #{causal_self_attention.3} parent=1 // pred_region
      _
    $region37: #{causal_self_attention.3} parent=1 // pred_fallthru
      _
    %164 = vsyncpa [#allocation4], 1
    %165 = vsyncpa [#allocation6], 1

// kernel: causal_self_attention.5
$region0: #{causal_self_attention.5}
  #allocation0 [shape = 'u32[]', space=smem, size = 0x4, offset = 0x4, fixed_abs, tag = 'smem constant byte address 0x4 - core index']
  #allocation1 [shape = 'u32[144,128]{1,0:T(1,128)}', space=vmem, size = 0x12000, scoped, tag = 'internal scratch']
  #allocation2 [shape = 'f32[16,32]{1,0:T(8,128)}', space=vmem, size = 0x2000, scoped, tag = 'scratch operand']
  %s0 = inlined_call_operand.vmem [shape: f32[16,32], index: 0, kind: input, shape index: {}]
  %s1 = inlined_call_operand.vmem [shape: f32[32,32], index: 1, kind: input, shape index: {}]
  %s2 = inlined_call_operand.vmem [shape: f32[1,32], index: 2, kind: input, shape index: {}]
  %s3 = inlined_call_operand.hbm [shape: f32[16,32], index: 3, kind: output, shape index: {}]
  %s4 = sld [smem:[#allocation0]]
  $region30: #{causal_self_attention.5} parent=0
    _
  %s6 = ssub.s32 1, %s4
  %s7 = scalar_select 0, %s6, %s4
  $region1: #{causal_self_attention.5} parent=0
    #allocation3 [shape = 'u8[8192]{0}', space=vmem, size = 0x2000, scoped, tag = 'output window, operand 0, single buffered']
    #allocation4 [shape = 's32[1]{0}', space=sflag, size = 0x4, scoped, tag = 'scoped memory for causal_self_attention.5']
    %8 = vsyncpa [#allocation4], 0
    // Predicated region
    $region2: #{causal_self_attention.5} parent=1 // pred_check
      _
    $region3: #{causal_self_attention.5} parent=1 // pred_check_branch
      %10 = sbr.rel (0) target = $region5
    $region4: #{causal_self_attention.5} parent=1 // pred_region
      _
    $region5: #{causal_self_attention.5} parent=1 // pred_fallthru
      _
    // Predicated region
    $region6: #{causal_self_attention.5} parent=1 // pred_check
      _
    $region7: #{causal_self_attention.5} parent=1 // pred_check_branch
      %12 = sbr.rel (0) target = $region9
    $region8: #{causal_self_attention.5} parent=1 // pred_region
      _
    $region9: #{causal_self_attention.5} parent=1 // pred_fallthru
      _
    // Predicated region
    $region10: #{causal_self_attention.5} parent=1 // pred_check
      _
    $region11: #{causal_self_attention.5} parent=1 // pred_check_branch
      %14 = sbr.rel (0) target = $region13
    $region12: #{causal_self_attention.5} parent=1 // pred_region
      _
    $region13: #{causal_self_attention.5} parent=1 // pred_fallthru
      _
    %p15 = scmp.eq.s32.totalorder 0, 0
    // Predicated region
    $region14: #{causal_self_attention.5} parent=1 // pred_check
      %p16 = pneg %p15
    $region15: #{causal_self_attention.5} parent=1 // pred_check_branch
      %18 = sbr.rel (%p16) target = $region17
    $region16: #{causal_self_attention.5} parent=1 // pred_region
      %vm19 = vcmask 261120
      %20 = vst.msk [vmem:[#allocation2] sm:$0xff] %vm19, 0.0
      %21 = vst.msk [vmem:[#allocation2 + $0x8] sm:$0xff] %vm19, 0.0
    $region17: #{causal_self_attention.5} parent=1 // pred_fallthru
      _
    %v22 = vld [vmem:[#allocation2] sm:$0xff]
    %v23 = vld [vmem:[#allocation2 + $0x8] sm:$0xff]
    %v24 = vld [vmem:[%s0] sm:$0xff]
    %v25 = vld [vmem:[%s0 + $0x8] sm:$0xff]
    %v26 = vld [vmem:[%s1] sm:$0xff]
    %v27 = vld [vmem:[%s1 + $0x8] sm:$0xff]
    %v28 = vld [vmem:[%s1 + $0x10] sm:$0xff]
    %v29 = vld [vmem:[%s1 + $0x18] sm:$0xff]
    %vm30 = vcmask 261120
    %v32 = vsel %vm30, %v24, 0
    %v35 = vsel %vm30, %v25, 0
    %37 = vmatprep.subr.mxu0 0.0
    %38 = vmatpush1.msra.mxu0 %v26
    %39 = vmatprep.subr.mxu0 0.0
    %40 = vmatpush1.msra.mxu0 %v27
    %41 = vmatprep.subr.mxu0 0.0
    %42 = vmatpush1.msra.mxu0 %v28
    %43 = vmatprep.subr.mxu0 0.0
    %44 = vmatpush1.msra.mxu0 %v29
    %45 = vmatprep.subr.mxu0 0.0
    %46 = vmatpush1.msra.mxu0 0.0
    %47 = vmatprep.subr.mxu0 0.0
    %48 = vmatpush1.msra.mxu0 0.0
    %49 = vmatprep.subr.mxu0 0.0
    %50 = vmatpush1.msra.mxu0 0.0
    %51 = vmatprep.subr.mxu0 0.0
    %52 = vmatpush1.msra.mxu0 0.0
    %53 = vmatprep.subr.mxu0 0.0
    %54 = vmatpush1.msra.mxu0 0.0
    %55 = vmatprep.subr.mxu0 0.0
    %56 = vmatpush1.msra.mxu0 0.0
    %57 = vmatprep.subr.mxu0 0.0
    %58 = vmatpush1.msra.mxu0 0.0
    %59 = vmatprep.subr.mxu0 0.0
    %60 = vmatpush1.msra.mxu0 0.0
    %61 = vmatprep.subr.mxu0 0.0
    %62 = vmatpush1.msra.mxu0 0.0
    %63 = vmatprep.subr.mxu0 0.0
    %64 = vmatpush1.msra.mxu0 0.0
    %65 = vmatprep.subr.mxu0 0.0
    %66 = vmatpush1.msra.mxu0 0.0
    %67 = vmatprep.subr.mxu0 0.0
    %68 = vmatpush1.msra.mxu0 0.0
    %69 = vmatprep.subr.mxu0 0.0
    %70 = vmatpush1.msra.mxu0 0.0
    %71 = vmatprep.subr.mxu0 0.0
    %72 = vmatpush1.msra.mxu0 0.0
    %73 = vmatprep.subr.mxu0 0.0
    %74 = vmatpush1.msra.mxu0 0.0
    %75 = vmatprep.subr.mxu0 0.0
    %76 = vmatpush1.msra.mxu0 0.0
    %77 = vmatprep.subr.mxu0 0.0
    %78 = vmatpush1.msra.mxu0 0.0
    %79 = vmatprep.subr.mxu0 0.0
    %80 = vmatpush1.msra.mxu0 0.0
    %81 = vmatprep.subr.mxu0 0.0
    %82 = vmatpush1.msra.mxu0 0.0
    %83 = vmatprep.subr.mxu0 0.0
    %84 = vmatpush1.msra.mxu0 0.0
    %85 = vmatprep.subr.mxu0 0.0
    %86 = vmatpush1.msra.mxu0 0.0
    %87 = vmatprep.subr.mxu0 0.0
    %88 = vmatpush1.msra.mxu0 0.0
    %89 = vmatprep.subr.mxu0 0.0
    %90 = vmatpush1.msra.mxu0 0.0
    %91 = vmatprep.subr.mxu0 0.0
    %92 = vmatpush1.msra.mxu0 0.0
    %93 = vmatprep.subr.mxu0 0.0
    %94 = vmatpush1.msra.mxu0 0.0
    %95 = vmatprep.subr.mxu0 0.0
    %96 = vmatpush1.msra.mxu0 0.0
    %97 = vmatprep.subr.mxu0 0.0
    %98 = vmatpush1.msra.mxu0 0.0
    %99 = vmatprep.subr.mxu0 0.0
    %100 = vmatpush1.msra.mxu0 0.0
    %101 = vmatprep.mubr.f32.mxu0 0.0
    %102 = vmatmul.mubr.f32.gmra.mrb[0].mxu0 %v32
    %v103 = vpop.f32.mrb[0].mxu0
    %v104 = vadd.f32 0.0, %v103
    %v105 = vpop.f32.mrb[0].mxu0
    %106 = vmatprep.mubr.f32.mxu0 0.0
    %107 = vmatmul.mubr.f32.gmra.mrb[0].mxu0 %v35
    %v108 = vpop.f32.mrb[0].mxu0
    %v109 = vadd.f32 0.0, %v108
    %v110 = vpop.f32.mrb[0].mxu0
    %111 = vdwg.mxu0
    %v112 = vadd.f32 %v22, %v104
    %v113 = vadd.f32 %v23, %v109
    %114 = vst.msk [vmem:[#allocation2] sm:$0xff] %vm30, %v112
    %115 = vst.msk [vmem:[#allocation2 + $0x8] sm:$0xff] %vm30, %v113
    // Predicated region
    $region18: #{causal_self_attention.5} parent=1 // pred_check
      %p116 = pneg %p15
    $region19: #{causal_self_attention.5} parent=1 // pred_check_branch
      %118 = sbr.rel (%p116) target = $region21
    $region20: #{causal_self_attention.5} parent=1 // pred_region
      %v119 = vld [vmem:[#allocation2] sm:$0xff]
      %v120 = vld [vmem:[#allocation2 + $0x8] sm:$0xff]
      %v121 = vld [vmem:[%s2] sm:$0x1]
      %v123 = vlaneseq
      %v124 = vshrl.u32 %v123, 7
      %v125 = vsub.s32 0, %v124
      %v126 = vrot.slane %v121, %v125
      %v128 = vadd.f32 %v119, %v126
      %v129 = vadd.f32 %v120, %v126
      %130 = vst.msk [vmem:[#allocation3] sm:$0xff] %vm30, %v128
      %131 = vst.msk [vmem:[#allocation3 + $0x8] sm:$0xff] %vm30, %v129
    $region21: #{causal_self_attention.5} parent=1 // pred_fallthru
      _
    // Predicated region
    $region22: #{causal_self_attention.5} parent=1 // pred_check
      _
    $region23: #{causal_self_attention.5} parent=1 // pred_check_branch
      %133 = sbr.rel (0) target = $region25
    $region24: #{causal_self_attention.5} parent=1 // pred_region
      %s135 = ssub.s32 256, 256
      %136 = vsyncadd [#allocation4], %s135
      %s137 = sshll.u32 [#allocation3], 4
      %s138 = int_to_ptr.vmem [resolvable:$true] %s137
      %143 = dma.vmem_to_hbm [thread:$0]  %s138, 256, %s3, [#allocation4], 128, 128, 8
    $region25: #{causal_self_attention.5} parent=1 // pred_fallthru
      _
    // Predicated region
    $region26: #{causal_self_attention.5} parent=1 // pred_check
      _
    $region27: #{causal_self_attention.5} parent=1 // pred_check_branch
      %145 = sbr.rel (0) target = $region29
    $region28: #{causal_self_attention.5} parent=1 // pred_region
      %146 = dma.done [#allocation4], 256
    $region29: #{causal_self_attention.5} parent=1 // pred_fallthru
      _
    %147 = vsyncpa [#allocation4], 1

// kernel: causal_self_attention.4
$region0: #{causal_self_attention.4}
  #allocation0 [shape = 'u32[]', space=smem, size = 0x4, offset = 0x4, fixed_abs, tag = 'smem constant byte address 0x4 - core index']
  #allocation1 [shape = 'u32[144,128]{1,0:T(1,128)}', space=vmem, size = 0x12000, scoped, tag = 'internal scratch']
  #allocation2 [shape = 'f32[8,1]{1,0:T(8,128)}', space=vmem, size = 0x1000, scoped, tag = 'scratch operand']
  #allocation3 [shape = 'f32[8,1]{1,0:T(8,128)}', space=vmem, size = 0x1000, scoped, tag = 'scratch operand']
  #allocation4 [shape = 'f32[8,8]{1,0:T(8,128)}', space=vmem, size = 0x1000, scoped, tag = 'scratch operand']
  %s0 = inlined_call_operand.vmem [shape: f32[2,4,8,8], index: 0, kind: input, shape index: {}]
  %s1 = inlined_call_operand.vmem [shape: f32[2,4,8,8], index: 1, kind: input, shape index: {}]
  %s2 = inlined_call_operand.vmem [shape: f32[2,4,8,8], index: 2, kind: input, shape index: {}]
  %s3 = inlined_call_operand.vmem [shape: f32[2,4,8,8], index: 3, kind: output, shape index: {}]
  %s4 = sld [smem:[#allocation0]]
  $region57: #{causal_self_attention.4} parent=0
    _
  %s6 = ssub.s32 1, %s4
  %s7 = scalar_select 0, %s6, %s4
  loop: start=0, step=1, limit=10
  $region2: #{causal_self_attention.4} parent=0 // loop_pre_header
    _
  $region3: #{causal_self_attention.4} parent=0 // loop_header
    %s9 = sphi 0, %s13
    %p10 = scmp.ge.s32.totalorder %s9, 10
    %s16 = sphi 0, %s42
    %s17 = sphi 0, %s38
    %s18 = sphi 0, %s34
    %s19 = sphi 0, %s30
    %s20 = sphi 0, %s16
    %s21 = sphi 0, %s17
    %s22 = sphi 0, %s18
    %s23 = sphi 0, %s19
    %s24 = sphi 0, %s20
    %s25 = sphi 0, %s21
    %s26 = sphi 0, %s22
    %s27 = sphi 0, %s23
    %s49 = sphi 0, %s51
    %s52 = sphi 0, %s49
    %s53 = sphi 0, %s52
    %s69 = sphi 0, %s53
    %s79 = sphi 0, %s81
    %s82 = sphi 0, %s79
    %s83 = sphi 0, %s82
    %s99 = sphi 0, %s83
    %s109 = sphi 0, %s111
    %s112 = sphi 0, %s109
    %s113 = sphi 0, %s112
    %s129 = sphi 0, %s113
    %s139 = sphi 0, %s141
    %s142 = sphi 0, %s139
    %s143 = sphi 0, %s142
    %s159 = sphi 0, %s143
  $region4: #{causal_self_attention.4} parent=0 // loop_header_branch
    %12 = sbr.rel (%p10) target = $region8
  $region5: #{causal_self_attention.4} parent=0 // loop_body
    %s14 = ssub.s32 %s9, 1
    %s15 = ssub.s32 %s9, 2
    %s28 = sadd.s32 1, %s19
    %p29 = scmp.ge.s32.totalorder %s28, 1
    %s30 = scalar_select %p29, 0, %s28
    %s31 = sadd.s32 1, %s18
    %s32 = scalar_select %p29, %s31, %s18
    %p33 = scmp.ge.s32.totalorder %s32, 1
    %s34 = scalar_select %p33, 0, %s32
    %s35 = sadd.s32 1, %s17
    %s36 = scalar_select %p33, %s35, %s17
    %p37 = scmp.ge.s32.totalorder %s36, 4
    %s38 = scalar_select %p37, 0, %s36
    %s39 = sadd.s32 1, %s16
    %s40 = scalar_select %p37, %s39, %s16
    %p41 = scmp.ge.s32.totalorder %s40, 2
    %s42 = scalar_select %p41, 0, %s40
    %s43 = ssub.s32 %s16, %s42
    %s44 = ssub.s32 %s17, %s38
    %s45 = sor.u32 %s43, %s44
    %s46 = ssub.s32 %s18, %s34
    %s47 = sor.u32 %s45, %s46
    %p48 = scmp.eq.s32.totalorder %s47, 0
    %s50 = sadd.s32 %s49, 1
    %s51 = scalar_select %p48, %s49, %s50
    %p54 = pneg %p48
    %p55 = scmp.eq.s32.totalorder %s9, 7
    %p56 = por %p54, %p55
    %p57 = scmp.ne.s32.totalorder %s49, %s52
    %p58 = scmp.eq.s32.totalorder %s9, 0
    %p59 = por %p57, %p58
    %p60 = scmp.ne.s32.totalorder %s49, %s52
    %p61 = scmp.eq.s32.totalorder %s14, 7
    %p62 = por %p60, %p61
    %p63 = scmp.ne.s32.totalorder %s52, %s53
    %p64 = scmp.eq.s32.totalorder %s14, 0
    %p65 = por %p63, %p64
    %p66 = scmp.ne.s32.totalorder %s52, %s53
    %p67 = scmp.eq.s32.totalorder %s15, 7
    %p68 = por %p66, %p67
    %p70 = scmp.ne.s32.totalorder %s53, %s69
    %p71 = scmp.eq.s32.totalorder %s15, 0
    %p72 = por %p70, %p71
    %s73 = ssub.s32 %s16, %s42
    %s74 = ssub.s32 %s17, %s38
    %s75 = sor.u32 %s73, %s74
    %s76 = ssub.s32 %s19, %s30
    %s77 = sor.u32 %s75, %s76
    %p78 = scmp.eq.s32.totalorder %s77, 0
    %s80 = sadd.s32 %s79, 1
    %s81 = scalar_select %p78, %s79, %s80
    %p84 = pneg %p78
    %p85 = scmp.eq.s32.totalorder %s9, 7
    %p86 = por %p84, %p85
    %p87 = scmp.ne.s32.totalorder %s79, %s82
    %p88 = scmp.eq.s32.totalorder %s9, 0
    %p89 = por %p87, %p88
    %p90 = scmp.ne.s32.totalorder %s79, %s82
    %p91 = scmp.eq.s32.totalorder %s14, 7
    %p92 = por %p90, %p91
    %p93 = scmp.ne.s32.totalorder %s82, %s83
    %p94 = scmp.eq.s32.totalorder %s14, 0
    %p95 = por %p93, %p94
    %p96 = scmp.ne.s32.totalorder %s82, %s83
    %p97 = scmp.eq.s32.totalorder %s15, 7
    %p98 = por %p96, %p97
    %p100 = scmp.ne.s32.totalorder %s83, %s99
    %p101 = scmp.eq.s32.totalorder %s15, 0
    %p102 = por %p100, %p101
    %s103 = ssub.s32 %s16, %s42
    %s104 = ssub.s32 %s17, %s38
    %s105 = sor.u32 %s103, %s104
    %s106 = ssub.s32 %s19, %s30
    %s107 = sor.u32 %s105, %s106
    %p108 = scmp.eq.s32.totalorder %s107, 0
    %s110 = sadd.s32 %s109, 1
    %s111 = scalar_select %p108, %s109, %s110
    %p114 = pneg %p108
    %p115 = scmp.eq.s32.totalorder %s9, 7
    %p116 = por %p114, %p115
    %p117 = scmp.ne.s32.totalorder %s109, %s112
    %p118 = scmp.eq.s32.totalorder %s9, 0
    %p119 = por %p117, %p118
    %p120 = scmp.ne.s32.totalorder %s109, %s112
    %p121 = scmp.eq.s32.totalorder %s14, 7
    %p122 = por %p120, %p121
    %p123 = scmp.ne.s32.totalorder %s112, %s113
    %p124 = scmp.eq.s32.totalorder %s14, 0
    %p125 = por %p123, %p124
    %p126 = scmp.ne.s32.totalorder %s112, %s113
    %p127 = scmp.eq.s32.totalorder %s15, 7
    %p128 = por %p126, %p127
    %p130 = scmp.ne.s32.totalorder %s113, %s129
    %p131 = scmp.eq.s32.totalorder %s15, 0
    %p132 = por %p130, %p131
    %s133 = ssub.s32 %s16, %s42
    %s134 = ssub.s32 %s17, %s38
    %s135 = sor.u32 %s133, %s134
    %s136 = ssub.s32 %s18, %s34
    %s137 = sor.u32 %s135, %s136
    %p138 = scmp.eq.s32.totalorder %s137, 0
    %s140 = sadd.s32 %s139, 1
    %s141 = scalar_select %p138, %s139, %s140
    %p144 = pneg %p138
    %p145 = scmp.eq.s32.totalorder %s9, 7
    %p146 = por %p144, %p145
    %p147 = scmp.ne.s32.totalorder %s139, %s142
    %p148 = scmp.eq.s32.totalorder %s9, 0
    %p149 = por %p147, %p148
    %p150 = scmp.ne.s32.totalorder %s139, %s142
    %p151 = scmp.eq.s32.totalorder %s14, 7
    %p152 = por %p150, %p151
    %p153 = scmp.ne.s32.totalorder %s142, %s143
    %p154 = scmp.eq.s32.totalorder %s14, 0
    %p155 = por %p153, %p154
    %p156 = scmp.ne.s32.totalorder %s142, %s143
    %p157 = scmp.eq.s32.totalorder %s15, 7
    %p158 = por %p156, %p157
    %p160 = scmp.ne.s32.totalorder %s143, %s159
    %p161 = scmp.eq.s32.totalorder %s15, 0
    %p162 = por %p160, %p161
    %p163 = scmp.le.s32.totalorder 1, %s9
    %p164 = scmp.lt.s32.totalorder %s9, 9
    %p165 = pnand %p163, %p164
    %p166 = pneg %p165
    // Predicated region
    $region9: #{causal_self_attention.4} parent=5 // pred_check
      _
    $region10: #{causal_self_attention.4} parent=5 // pred_check_branch
      %168 = sbr.rel (%p165) target = $region12
    $region11: #{causal_self_attention.4} parent=5 // pred_region
      %s169 = ssub.s32 %s9, 1
    $region12: #{causal_self_attention.4} parent=5 // pred_fallthru
      _
    %p170 = scmp.lt.s32.totalorder %s9, 8
    // Predicated region
    $region13: #{causal_self_attention.4} parent=5 // pred_check
      %p171 = pneg %p170
    $region14: #{causal_self_attention.4} parent=5 // pred_check_branch
      %173 = sbr.rel (%p171) target = $region16
    $region15: #{causal_self_attention.4} parent=5 // pred_region
      // Predicated region
      $region17: #{causal_self_attention.4} parent=15 // pred_check
        %p174 = pneg %p59
      $region18: #{causal_self_attention.4} parent=15 // pred_check_branch
        %176 = sbr.rel (%p174) target = $region20
      $region19: #{causal_self_attention.4} parent=15 // pred_region
        %p177 = scmp.lt.s32.totalorder %s16, 1
        %s178 = scalar_select %p177, %s16, 1
        %p179 = scmp.lt.s32.totalorder %s17, 3
        %s180 = scalar_select %p179, %s17, 3
        %p181 = scmp.lt.s32.totalorder %s18, 0
        %s182 = scalar_select %p181, %s18, 0
        %s183 = sadd.s32 %s182, %s180
        %s184 = smul.addr %s178, 4
        %s185 = sadd.s32 %s183, %s184
        %s186 = smul.addr %s185, 8
        %s187 = scalar_lea.vmem %s0, %s186
      $region20: #{causal_self_attention.4} parent=15 // pred_fallthru
        _
      // Predicated region
      $region21: #{causal_self_attention.4} parent=15 // pred_check
        %p188 = pneg %p89
      $region22: #{causal_self_attention.4} parent=15 // pred_check_branch
        %190 = sbr.rel (%p188) target = $region24
      $region23: #{causal_self_attention.4} parent=15 // pred_region
        %p191 = scmp.lt.s32.totalorder %s16, 1
        %s192 = scalar_select %p191, %s16, 1
        %p193 = scmp.lt.s32.totalorder %s17, 3
        %s194 = scalar_select %p193, %s17, 3
        %p195 = scmp.lt.s32.totalorder %s19, 0
        %s196 = scalar_select %p195, %s19, 0
        %s197 = sadd.s32 %s196, %s194
        %s198 = smul.addr %s192, 4
        %s199 = sadd.s32 %s197, %s198
        %s200 = smul.addr %s199, 8
        %s201 = scalar_lea.vmem %s1, %s200
      $region24: #{causal_self_attention.4} parent=15 // pred_fallthru
        _
      // Predicated region
      $region25: #{causal_self_attention.4} parent=15 // pred_check
        %p202 = pneg %p119
      $region26: #{causal_self_attention.4} parent=15 // pred_check_branch
        %204 = sbr.rel (%p202) target = $region28
      $region27: #{causal_self_attention.4} parent=15 // pred_region
        %p205 = scmp.lt.s32.totalorder %s16, 1
        %s206 = scalar_select %p205, %s16, 1
        %p207 = scmp.lt.s32.totalorder %s17, 3
        %s208 = scalar_select %p207, %s17, 3
        %p209 = scmp.lt.s32.totalorder %s19, 0
        %s210 = scalar_select %p209, %s19, 0
        %s211 = sadd.s32 %s210, %s208
        %s212 = smul.addr %s206, 4
        %s213 = sadd.s32 %s211, %s212
        %s214 = smul.addr %s213, 8
        %s215 = scalar_lea.vmem %s2, %s214
      $region28: #{causal_self_attention.4} parent=15 // pred_fallthru
        _
    $region16: #{causal_self_attention.4} parent=5 // pred_fallthru
      _
    %p216 = scmp.le.s32.totalorder 1, %s9
    %p217 = scmp.lt.s32.totalorder %s9, 9
    %p218 = pnand %p216, %p217
    %p219 = pneg %p218
    // Predicated region
    $region29: #{causal_self_attention.4} parent=5 // pred_check
      _
    $region30: #{causal_self_attention.4} parent=5 // pred_check_branch
      %221 = sbr.rel (%p218) target = $region32
    $region31: #{causal_self_attention.4} parent=5 // pred_region
      %s222 = ssub.s32 %s9, 1
      %p223 = scmp.lt.s32.totalorder %s20, 1
      %s224 = scalar_select %p223, %s20, 1
      %p225 = scmp.lt.s32.totalorder %s21, 3
      %s226 = scalar_select %p225, %s21, 3
      %p227 = scmp.lt.s32.totalorder %s22, 0
      %s228 = scalar_select %p227, %s22, 0
      %s229 = sadd.s32 %s228, %s226
      %s230 = smul.addr %s224, 4
      %s231 = sadd.s32 %s229, %s230
      %s232 = smul.addr %s231, 8
      %s233 = scalar_lea.vmem %s0, %s232
      %p234 = pneg %p65
      %p235 = pneg %p62
      %p236 = scmp.lt.s32.totalorder %s20, 1
      %s237 = scalar_select %p236, %s20, 1
      %p238 = scmp.lt.s32.totalorder %s21, 3
      %s239 = scalar_select %p238, %s21, 3
      %p240 = scmp.lt.s32.totalorder %s23, 0
      %s241 = scalar_select %p240, %s23, 0
      %s242 = sadd.s32 %s241, %s239
      %s243 = smul.addr %s237, 4
      %s244 = sadd.s32 %s242, %s243
      %s245 = smul.addr %s244, 8
      %s246 = scalar_lea.vmem %s1, %s245
      %p247 = pneg %p95
      %p248 = pneg %p92
      %p249 = scmp.lt.s32.totalorder %s20, 1
      %s250 = scalar_select %p249, %s20, 1
      %p251 = scmp.lt.s32.totalorder %s21, 3
      %s252 = scalar_select %p251, %s21, 3
      %p253 = scmp.lt.s32.totalorder %s23, 0
      %s254 = scalar_select %p253, %s23, 0
      %s255 = sadd.s32 %s254, %s252
      %s256 = smul.addr %s250, 4
      %s257 = sadd.s32 %s255, %s256
      %s258 = smul.addr %s257, 8
      %s259 = scalar_lea.vmem %s2, %s258
      %p260 = pneg %p125
      %p261 = pneg %p122
      %p262 = pneg %p155
      %p263 = pneg %p152
      %p264 = scmp.lt.s32.totalorder %s20, 1
      %s265 = scalar_select %p264, %s20, 1
      %p266 = scmp.lt.s32.totalorder %s21, 3
      %s267 = scalar_select %p266, %s21, 3
      %p268 = scmp.lt.s32.totalorder %s22, 0
      %s269 = scalar_select %p268, %s22, 0
      %s270 = sadd.s32 %s269, %s267
      %s271 = smul.addr %s265, 4
      %s272 = sadd.s32 %s270, %s271
      %s273 = smul.addr %s272, 8
      %s274 = scalar_lea.vmem %s3, %s273
      %p275 = scmp.lt.s32.totalorder %s20, 1
      %s276 = scalar_select %p275, %s20, 1
      %p277 = scmp.lt.s32.totalorder %s21, 3
      %s278 = scalar_select %p277, %s21, 3
      %p279 = scmp.lt.s32.totalorder %s22, 0
      %s280 = scalar_select %p279, %s22, 0
      %s281 = sadd.s32 %s280, %s278
      %s282 = smul.addr %s276, 4
      %s283 = sadd.s32 %s281, %s282
      %s284 = smul.addr %s283, 8
      %s285 = scalar_lea.vmem %s0, %s284
      %p286 = scmp.lt.s32.totalorder %s20, 1
      %s287 = scalar_select %p286, %s20, 1
      %p288 = scmp.lt.s32.totalorder %s21, 3
      %s289 = scalar_select %p288, %s21, 3
      %p290 = scmp.lt.s32.totalorder %s23, 0
      %s291 = scalar_select %p290, %s23, 0
      %s292 = sadd.s32 %s291, %s289
      %s293 = smul.addr %s287, 4
      %s294 = sadd.s32 %s292, %s293
      %s295 = smul.addr %s294, 8
      %s296 = scalar_lea.vmem %s1, %s295
      %p297 = scmp.lt.s32.totalorder %s20, 1
      %s298 = scalar_select %p297, %s20, 1
      %p299 = scmp.lt.s32.totalorder %s21, 3
      %s300 = scalar_select %p299, %s21, 3
      %p301 = scmp.lt.s32.totalorder %s23, 0
      %s302 = scalar_select %p301, %s23, 0
      %s303 = sadd.s32 %s302, %s300
      %s304 = smul.addr %s298, 4
      %s305 = sadd.s32 %s303, %s304
      %s306 = smul.addr %s305, 8
      %s307 = scalar_lea.vmem %s2, %s306
      %p308 = scmp.lt.s32.totalorder %s20, 1
      %s309 = scalar_select %p308, %s20, 1
      %p310 = scmp.lt.s32.totalorder %s21, 3
      %s311 = scalar_select %p310, %s21, 3
      %p312 = scmp.lt.s32.totalorder %s22, 0
      %s313 = scalar_select %p312, %s22, 0
      %s314 = sadd.s32 %s313, %s311
      %s315 = smul.addr %s309, 4
      %s316 = sadd.s32 %s314, %s315
      %s317 = smul.addr %s316, 8
      %s318 = scalar_lea.vmem %s3, %s317
      %p319 = scmp.eq.s32.totalorder %s23, 0
      // Predicated region
      $region33: #{causal_self_attention.4} parent=31 // pred_check
        %p320 = pneg %p319
      $region34: #{causal_self_attention.4} parent=31 // pred_check_branch
        %322 = sbr.rel (%p320) target = $region36
      $region35: #{causal_self_attention.4} parent=31 // pred_region
        %vm323 = vcmask 7168
        %324 = vst.msk [vmem:[#allocation2] sm:$0xff] %vm323, -inf
        %325 = vst.msk [vmem:[#allocation3] sm:$0xff] %vm323, 0.0
        %vm326 = vcmask 64512
        %327 = vst.msk [vmem:[#allocation4] sm:$0xff] %vm326, 0.0
      $region36: #{causal_self_attention.4} parent=31 // pred_fallthru
        _
      %p328 = scmp.lt.s32.totalorder %s23, %s22
      // Predicated region
      $region37: #{causal_self_attention.4} parent=31 // pred_check
        %p329 = pneg %p328
      $region38: #{causal_self_attention.4} parent=31 // pred_check_branch
        %331 = sbr.rel (%p329) target = $region40
      $region39: #{causal_self_attention.4} parent=31 // pred_region
        %v332 = vld [vmem:[%s285] sm:$0xff]
        %v333 = vmul.f32 %v332, 0.17677669
        %v334 = vld [vmem:[%s296] sm:$0xff]
        %v335 = vld [vmem:[%s307] sm:$0xff]
        %vm336 = vcmask 64512
        %v338 = vsel %vm336, %v333, 0
        %v341 = vsel %vm336, %v334, 0
        %343 = vmatprep.subr.mxu0 0.0
        %344 = vmatpush1.xpose.msra.mxu0 %v341
        %345 = vmatprep.subr.mxu0 0.0
        %346 = vmatpush1.xpose.msra.mxu0 0.0
        %347 = vmatprep.subr.mxu0 0.0
        %348 = vmatpush1.xpose.msra.mxu0 0.0
        %349 = vmatprep.subr.mxu0 0.0
        %350 = vmatpush1.xpose.msra.mxu0 0.0
        %351 = vmatprep.subr.mxu0 0.0
        %352 = vmatpush1.xpose.msra.mxu0 0.0
        %353 = vmatprep.subr.mxu0 0.0
        %354 = vmatpush1.xpose.msra.mxu0 0.0
        %355 = vmatprep.subr.mxu0 0.0
        %356 = vmatpush1.xpose.msra.mxu0 0.0
        %357 = vmatprep.subr.mxu0 0.0
        %358 = vmatpush1.xpose.msra.mxu0 0.0
        %359 = vmatprep.subr.mxu0 0.0
        %360 = vmatpush1.xpose.msra.mxu0 0.0
        %361 = vmatprep.subr.mxu0 0.0
        %362 = vmatpush1.xpose.msra.mxu0 0.0
        %363 = vmatprep.subr.mxu0 0.0
        %364 = vmatpush1.xpose.msra.mxu0 0.0
        %365 = vmatprep.subr.mxu0 0.0
        %366 = vmatpush1.xpose.msra.mxu0 0.0
        %367 = vmatprep.subr.mxu0 0.0
        %368 = vmatpush1.xpose.msra.mxu0 0.0
        %369 = vmatprep.subr.mxu0 0.0
        %370 = vmatpush1.xpose.msra.mxu0 0.0
        %371 = vmatprep.subr.mxu0 0.0
        %372 = vmatpush1.xpose.msra.mxu0 0.0
        %373 = vmatprep.subr.mxu0 0.0
        %374 = vmatpush1.xpose.msra.mxu0 0.0
        %375 = vmatprep.subr.mxu0 0.0
        %376 = vmatpush1.xpose.msra.mxu0 0.0
        %377 = vmatprep.subr.mxu0 0.0
        %378 = vmatpush1.xpose.msra.mxu0 0.0
        %379 = vmatprep.subr.mxu0 0.0
        %380 = vmatpush1.xpose.msra.mxu0 0.0
        %381 = vmatprep.subr.mxu0 0.0
        %382 = vmatpush1.xpose.msra.mxu0 0.0
        %383 = vmatprep.subr.mxu0 0.0
        %384 = vmatpush1.xpose.msra.mxu0 0.0
        %385 = vmatprep.subr.mxu0 0.0
        %386 = vmatpush1.xpose.msra.mxu0 0.0
        %387 = vmatprep.subr.mxu0 0.0
        %388 = vmatpush1.xpose.msra.mxu0 0.0
        %389 = vmatprep.subr.mxu0 0.0
        %390 = vmatpush1.xpose.msra.mxu0 0.0
        %391 = vmatprep.subr.mxu0 0.0
        %392 = vmatpush1.xpose.msra.mxu0 0.0
        %393 = vmatprep.subr.mxu0 0.0
        %394 = vmatpush1.xpose.msra.mxu0 0.0
        %395 = vmatprep.subr.mxu0 0.0
        %396 = vmatpush1.xpose.msra.mxu0 0.0
        %397 = vmatprep.subr.mxu0 0.0
        %398 = vmatpush1.xpose.msra.mxu0 0.0
        %399 = vmatprep.subr.mxu0 0.0
        %400 = vmatpush1.xpose.msra.mxu0 0.0
        %401 = vmatprep.subr.mxu0 0.0
        %402 = vmatpush1.xpose.msra.mxu0 0.0
        %403 = vmatprep.subr.mxu0 0.0
        %404 = vmatpush1.xpose.msra.mxu0 0.0
        %405 = vmatprep.subr.mxu0 0.0
        %406 = vmatpush1.xpose.msra.mxu0 0.0
        %407 = vmatprep.mubr.f32.mxu0 0.0
        %408 = vmatmul.mubr.f32.gmra.mrb[0].mxu0 %v338
        %v409 = vpop.f32.mrb[0].mxu0
        %v410 = vadd.f32 0.0, %v409
        %v411 = vpop.f32.mrb[0].mxu0
        %412 = vdwg.mxu0
        %v413 = vld [vmem:[#allocation2] sm:$0xff]
        %v414 = vsel %vm336, %v410, -inf
        %415 = vmax.xlane.f32.xlu0 %v414
        %v416 = vpop.xlane.xlu0 %415
        %v417 = vmax.f32 %v413, %v416
        %v418 = vsub.f32 %v413, %v417
        %v419 = vmul.f32 %v418, 1.442695
        %v420 = vpow.pop %v419
        %422 = vset.pattern.permute.xlu0 0
        %423 = vperm.xlu0 %422, %v417
        %v424 = vpop.permute.xlu0 %423
        %v426 = vsub.f32 %v410, %v424
        %v427 = vmul.f32 %v426, 1.442695
        %v428 = vpow.pop %v427
        %v429 = vld [vmem:[#allocation3] sm:$0xff]
        %v430 = vmul.f32 %v420, %v429
        %v431 = vsel %vm336, %v428, 0.0
        %432 = vadd.xlane.f32.xlu0 %v431
        %v433 = vpop.xlane.xlu0 %432
        %v434 = vadd.f32 %v430, %v433
        %vm435 = vcmask 7168
        %436 = vst.msk [vmem:[#allocation3] sm:$0xff] %vm435, %v434
        %v437 = vld [vmem:[#allocation4] sm:$0xff]
        %439 = vset.pattern.permute.xlu0 0
        %440 = vperm.xlu0 %439, %v420
        %v441 = vpop.permute.xlu0 %440
        %v443 = vmul.f32 %v441, %v437
        %v445 = vsel %vm336, %v428, 0
        %447 = vmatprep.subr.mxu0 0.0
        %448 = vmatpush1.msra.mxu0 %v335
        %449 = vmatprep.subr.mxu0 0.0
        %450 = vmatpush1.msra.mxu0 0.0
        %451 = vmatprep.subr.mxu0 0.0
        %452 = vmatpush1.msra.mxu0 0.0
        %453 = vmatprep.subr.mxu0 0.0
        %454 = vmatpush1.msra.mxu0 0.0
        %455 = vmatprep.subr.mxu0 0.0
        %456 = vmatpush1.msra.mxu0 0.0
        %457 = vmatprep.subr.mxu0 0.0
        %458 = vmatpush1.msra.mxu0 0.0
        %459 = vmatprep.subr.mxu0 0.0
        %460 = vmatpush1.msra.mxu0 0.0
        %461 = vmatprep.subr.mxu0 0.0
        %462 = vmatpush1.msra.mxu0 0.0
        %463 = vmatprep.subr.mxu0 0.0
        %464 = vmatpush1.msra.mxu0 0.0
        %465 = vmatprep.subr.mxu0 0.0
        %466 = vmatpush1.msra.mxu0 0.0
        %467 = vmatprep.subr.mxu0 0.0
        %468 = vmatpush1.msra.mxu0 0.0
        %469 = vmatprep.subr.mxu0 0.0
        %470 = vmatpush1.msra.mxu0 0.0
        %471 = vmatprep.subr.mxu0 0.0
        %472 = vmatpush1.msra.mxu0 0.0
        %473 = vmatprep.subr.mxu0 0.0
        %474 = vmatpush1.msra.mxu0 0.0
        %475 = vmatprep.subr.mxu0 0.0
        %476 = vmatpush1.msra.mxu0 0.0
        %477 = vmatprep.subr.mxu0 0.0
        %478 = vmatpush1.msra.mxu0 0.0
        %479 = vmatprep.subr.mxu0 0.0
        %480 = vmatpush1.msra.mxu0 0.0
        %481 = vmatprep.subr.mxu0 0.0
        %482 = vmatpush1.msra.mxu0 0.0
        %483 = vmatprep.subr.mxu0 0.0
        %484 = vmatpush1.msra.mxu0 0.0
        %485 = vmatprep.subr.mxu0 0.0
        %486 = vmatpush1.msra.mxu0 0.0
        %487 = vmatprep.subr.mxu0 0.0
        %488 = vmatpush1.msra.mxu0 0.0
        %489 = vmatprep.subr.mxu0 0.0
        %490 = vmatpush1.msra.mxu0 0.0
        %491 = vmatprep.subr.mxu0 0.0
        %492 = vmatpush1.msra.mxu0 0.0
        %493 = vmatprep.subr.mxu0 0.0
        %494 = vmatpush1.msra.mxu0 0.0
        %495 = vmatprep.subr.mxu0 0.0
        %496 = vmatpush1.msra.mxu0 0.0
        %497 = vmatprep.subr.mxu0 0.0
        %498 = vmatpush1.msra.mxu0 0.0
        %499 = vmatprep.subr.mxu0 0.0
        %500 = vmatpush1.msra.mxu0 0.0
        %501 = vmatprep.subr.mxu0 0.0
        %502 = vmatpush1.msra.mxu0 0.0
        %503 = vmatprep.subr.mxu0 0.0
        %504 = vmatpush1.msra.mxu0 0.0
        %505 = vmatprep.subr.mxu0 0.0
        %506 = vmatpush1.msra.mxu0 0.0
        %507 = vmatprep.subr.mxu0 0.0
        %508 = vmatpush1.msra.mxu0 0.0
        %509 = vmatprep.subr.mxu0 0.0
        %510 = vmatpush1.msra.mxu0 0.0
        %511 = vmatprep.mubr.f32.mxu0 0.0
        %512 = vmatmul.mubr.f32.gmra.mrb[0].mxu0 %v445
        %v513 = vpop.f32.mrb[0].mxu0
        %v514 = vadd.f32 0.0, %v513
        %v515 = vpop.f32.mrb[0].mxu0
        %516 = vdwg.mxu0
        %v517 = vadd.f32 %v443, %v514
        %518 = vst.msk [vmem:[#allocation4] sm:$0xff] %vm336, %v517
        %519 = vst.msk [vmem:[#allocation2] sm:$0xff] %vm435, %v417
      $region40: #{causal_self_attention.4} parent=31 // pred_fallthru
        _
      %p520 = scmp.eq.s32.totalorder %s23, %s22
      // Predicated region
      $region41: #{causal_self_attention.4} parent=31 // pred_check
        %p521 = pneg %p520
      $region42: #{causal_self_attention.4} parent=31 // pred_check_branch
        %523 = sbr.rel (%p521) target = $region44
      $region43: #{causal_self_attention.4} parent=31 // pred_region
        %v524 = vld [vmem:[%s285] sm:$0xff]
        %v525 = vmul.f32 %v524, 0.17677669
        %v526 = vld [vmem:[%s296] sm:$0xff]
        %v527 = vld [vmem:[%s307] sm:$0xff]
        %vm528 = vcmask 64512
        %v530 = vsel %vm528, %v525, 0
        %v533 = vsel %vm528, %v526, 0
        %535 = vmatprep.subr.mxu0 0.0
        %536 = vmatpush1.xpose.msra.mxu0 %v533
        %537 = vmatprep.subr.mxu0 0.0
        %538 = vmatpush1.xpose.msra.mxu0 0.0
        %539 = vmatprep.subr.mxu0 0.0
        %540 = vmatpush1.xpose.msra.mxu0 0.0
        %541 = vmatprep.subr.mxu0 0.0
        %542 = vmatpush1.xpose.msra.mxu0 0.0
        %543 = vmatprep.subr.mxu0 0.0
        %544 = vmatpush1.xpose.msra.mxu0 0.0
        %545 = vmatprep.subr.mxu0 0.0
        %546 = vmatpush1.xpose.msra.mxu0 0.0
        %547 = vmatprep.subr.mxu0 0.0
        %548 = vmatpush1.xpose.msra.mxu0 0.0
        %549 = vmatprep.subr.mxu0 0.0
        %550 = vmatpush1.xpose.msra.mxu0 0.0
        %551 = vmatprep.subr.mxu0 0.0
        %552 = vmatpush1.xpose.msra.mxu0 0.0
        %553 = vmatprep.subr.mxu0 0.0
        %554 = vmatpush1.xpose.msra.mxu0 0.0
        %555 = vmatprep.subr.mxu0 0.0
        %556 = vmatpush1.xpose.msra.mxu0 0.0
        %557 = vmatprep.subr.mxu0 0.0
        %558 = vmatpush1.xpose.msra.mxu0 0.0
        %559 = vmatprep.subr.mxu0 0.0
        %560 = vmatpush1.xpose.msra.mxu0 0.0
        %561 = vmatprep.subr.mxu0 0.0
        %562 = vmatpush1.xpose.msra.mxu0 0.0
        %563 = vmatprep.subr.mxu0 0.0
        %564 = vmatpush1.xpose.msra.mxu0 0.0
        %565 = vmatprep.subr.mxu0 0.0
        %566 = vmatpush1.xpose.msra.mxu0 0.0
        %567 = vmatprep.subr.mxu0 0.0
        %568 = vmatpush1.xpose.msra.mxu0 0.0
        %569 = vmatprep.subr.mxu0 0.0
        %570 = vmatpush1.xpose.msra.mxu0 0.0
        %571 = vmatprep.subr.mxu0 0.0
        %572 = vmatpush1.xpose.msra.mxu0 0.0
        %573 = vmatprep.subr.mxu0 0.0
        %574 = vmatpush1.xpose.msra.mxu0 0.0
        %575 = vmatprep.subr.mxu0 0.0
        %576 = vmatpush1.xpose.msra.mxu0 0.0
        %577 = vmatprep.subr.mxu0 0.0
        %578 = vmatpush1.xpose.msra.mxu0 0.0
        %579 = vmatprep.subr.mxu0 0.0
        %580 = vmatpush1.xpose.msra.mxu0 0.0
        %581 = vmatprep.subr.mxu0 0.0
        %582 = vmatpush1.xpose.msra.mxu0 0.0
        %583 = vmatprep.subr.mxu0 0.0
        %584 = vmatpush1.xpose.msra.mxu0 0.0
        %585 = vmatprep.subr.mxu0 0.0
        %586 = vmatpush1.xpose.msra.mxu0 0.0
        %587 = vmatprep.subr.mxu0 0.0
        %588 = vmatpush1.xpose.msra.mxu0 0.0
        %589 = vmatprep.subr.mxu0 0.0
        %590 = vmatpush1.xpose.msra.mxu0 0.0
        %591 = vmatprep.subr.mxu0 0.0
        %592 = vmatpush1.xpose.msra.mxu0 0.0
        %593 = vmatprep.subr.mxu0 0.0
        %594 = vmatpush1.xpose.msra.mxu0 0.0
        %595 = vmatprep.subr.mxu0 0.0
        %596 = vmatpush1.xpose.msra.mxu0 0.0
        %597 = vmatprep.subr.mxu0 0.0
        %598 = vmatpush1.xpose.msra.mxu0 0.0
        %599 = vmatprep.mubr.f32.mxu0 0.0
        %600 = vmatmul.mubr.f32.gmra.mrb[0].mxu0 %v530
        %v601 = vpop.f32.mrb[0].mxu0
        %v602 = vadd.f32 0.0, %v601
        %v603 = vpop.f32.mrb[0].mxu0
        %604 = vdwg.mxu0
        %v605 = vlaneseq
        %v606 = vshrl.u32 %v605, 7
        %v607 = vlaneseq
        %v608 = vand.u32 %v607, 127
        %vm609 = vcmp.ge.s32.totalorder %v606, %v608
        %v610 = vsel %vm609, %v602, -1e+30
        %v611 = vld [vmem:[#allocation2] sm:$0xff]
        %v612 = vsel %vm528, %v610, -inf
        %613 = vmax.xlane.f32.xlu0 %v612
        %v614 = vpop.xlane.xlu0 %613
        %v615 = vmax.f32 %v611, %v614
        %v616 = vsub.f32 %v611, %v615
        %v617 = vmul.f32 %v616, 1.442695
        %v618 = vpow.pop %v617
        %620 = vset.pattern.permute.xlu0 0
        %621 = vperm.xlu0 %620, %v615
        %v622 = vpop.permute.xlu0 %621
        %v624 = vsub.f32 %v610, %v622
        %v625 = vmul.f32 %v624, 1.442695
        %v626 = vpow.pop %v625
        %v627 = vld [vmem:[#allocation3] sm:$0xff]
        %v628 = vmul.f32 %v618, %v627
        %v629 = vsel %vm528, %v626, 0.0
        %630 = vadd.xlane.f32.xlu0 %v629
        %v631 = vpop.xlane.xlu0 %630
        %v632 = vadd.f32 %v628, %v631
        %vm633 = vcmask 7168
        %634 = vst.msk [vmem:[#allocation3] sm:$0xff] %vm633, %v632
        %v635 = vld [vmem:[#allocation4] sm:$0xff]
        %637 = vset.pattern.permute.xlu0 0
        %638 = vperm.xlu0 %637, %v618
        %v639 = vpop.permute.xlu0 %638
        %v641 = vmul.f32 %v639, %v635
        %v643 = vsel %vm528, %v626, 0
        %645 = vmatprep.subr.mxu0 0.0
        %646 = vmatpush1.msra.mxu0 %v527
        %647 = vmatprep.subr.mxu0 0.0
        %648 = vmatpush1.msra.mxu0 0.0
        %649 = vmatprep.subr.mxu0 0.0
        %650 = vmatpush1.msra.mxu0 0.0
        %651 = vmatprep.subr.mxu0 0.0
        %652 = vmatpush1.msra.mxu0 0.0
        %653 = vmatprep.subr.mxu0 0.0
        %654 = vmatpush1.msra.mxu0 0.0
        %655 = vmatprep.subr.mxu0 0.0
        %656 = vmatpush1.msra.mxu0 0.0
        %657 = vmatprep.subr.mxu0 0.0
        %658 = vmatpush1.msra.mxu0 0.0
        %659 = vmatprep.subr.mxu0 0.0
        %660 = vmatpush1.msra.mxu0 0.0
        %661 = vmatprep.subr.mxu0 0.0
        %662 = vmatpush1.msra.mxu0 0.0
        %663 = vmatprep.subr.mxu0 0.0
        %664 = vmatpush1.msra.mxu0 0.0
        %665 = vmatprep.subr.mxu0 0.0
        %666 = vmatpush1.msra.mxu0 0.0
        %667 = vmatprep.subr.mxu0 0.0
        %668 = vmatpush1.msra.mxu0 0.0
        %669 = vmatprep.subr.mxu0 0.0
        %670 = vmatpush1.msra.mxu0 0.0
        %671 = vmatprep.subr.mxu0 0.0
        %672 = vmatpush1.msra.mxu0 0.0
        %673 = vmatprep.subr.mxu0 0.0
        %674 = vmatpush1.msra.mxu0 0.0
        %675 = vmatprep.subr.mxu0 0.0
        %676 = vmatpush1.msra.mxu0 0.0
        %677 = vmatprep.subr.mxu0 0.0
        %678 = vmatpush1.msra.mxu0 0.0
        %679 = vmatprep.subr.mxu0 0.0
        %680 = vmatpush1.msra.mxu0 0.0
        %681 = vmatprep.subr.mxu0 0.0
        %682 = vmatpush1.msra.mxu0 0.0
        %683 = vmatprep.subr.mxu0 0.0
        %684 = vmatpush1.msra.mxu0 0.0
        %685 = vmatprep.subr.mxu0 0.0
        %686 = vmatpush1.msra.mxu0 0.0
        %687 = vmatprep.subr.mxu0 0.0
        %688 = vmatpush1.msra.mxu0 0.0
        %689 = vmatprep.subr.mxu0 0.0
        %690 = vmatpush1.msra.mxu0 0.0
        %691 = vmatprep.subr.mxu0 0.0
        %692 = vmatpush1.msra.mxu0 0.0
        %693 = vmatprep.subr.mxu0 0.0
        %694 = vmatpush1.msra.mxu0 0.0
        %695 = vmatprep.subr.mxu0 0.0
        %696 = vmatpush1.msra.mxu0 0.0
        %697 = vmatprep.subr.mxu0 0.0
        %698 = vmatpush1.msra.mxu0 0.0
        %699 = vmatprep.subr.mxu0 0.0
        %700 = vmatpush1.msra.mxu0 0.0
        %701 = vmatprep.subr.mxu0 0.0
        %702 = vmatpush1.msra.mxu0 0.0
        %703 = vmatprep.subr.mxu0 0.0
        %704 = vmatpush1.msra.mxu0 0.0
        %705 = vmatprep.subr.mxu0 0.0
        %706 = vmatpush1.msra.mxu0 0.0
        %707 = vmatprep.subr.mxu0 0.0
        %708 = vmatpush1.msra.mxu0 0.0
        %709 = vmatprep.mubr.f32.mxu0 0.0
        %710 = vmatmul.mubr.f32.gmra.mrb[0].mxu0 %v643
        %v711 = vpop.f32.mrb[0].mxu0
        %v712 = vadd.f32 0.0, %v711
        %v713 = vpop.f32.mrb[0].mxu0
        %714 = vdwg.mxu0
        %v715 = vadd.f32 %v641, %v712
        %716 = vst.msk [vmem:[#allocation4] sm:$0xff] %vm528, %v715
        %717 = vst.msk [vmem:[#allocation2] sm:$0xff] %vm633, %v615
        %v718 = vld [vmem:[#allocation4] sm:$0xff]
        %v719 = vld [vmem:[#allocation3] sm:$0xff]
        %v720 = vrcp.pop %v719
        %722 = vset.pattern.permute.xlu0 0
        %723 = vperm.xlu0 %722, %v720
        %v724 = vpop.permute.xlu0 %723
        %v726 = vmul.f32 %v718, %v724
        %727 = vst.msk [vmem:[%s318] sm:$0xff] %vm528, %v726
      $region44: #{causal_self_attention.4} parent=31 // pred_fallthru
        _
      %p728 = scmp.lt.s32.totalorder %s20, 1
      %s729 = scalar_select %p728, %s20, 1
      %p730 = scmp.lt.s32.totalorder %s21, 3
      %s731 = scalar_select %p730, %s21, 3
      %p732 = scmp.lt.s32.totalorder %s22, 0
      %s733 = scalar_select %p732, %s22, 0
      %s734 = sadd.s32 %s733, %s731
      %s735 = smul.addr %s729, 4
      %s736 = sadd.s32 %s734, %s735
      %s737 = smul.addr %s736, 8
      %s738 = scalar_lea.vmem %s3, %s737
      // Predicated region
      $region45: #{causal_self_attention.4} parent=31 // pred_check
        %p739 = pneg %p152
      $region46: #{causal_self_attention.4} parent=31 // pred_check_branch
        %741 = sbr.rel (%p739) target = $region48
      $region47: #{causal_self_attention.4} parent=31 // pred_region
        _
      $region48: #{causal_self_attention.4} parent=31 // pred_fallthru
        _
    $region32: #{causal_self_attention.4} parent=5 // pred_fallthru
      _
    %p742 = scmp.le.s32.totalorder 2, %s9
    // Predicated region
    $region49: #{causal_self_attention.4} parent=5 // pred_check
      %p743 = pneg %p742
    $region50: #{causal_self_attention.4} parent=5 // pred_check_branch
      %745 = sbr.rel (%p743) target = $region52
    $region51: #{causal_self_attention.4} parent=5 // pred_region
      %s746 = ssub.s32 %s9, 2
      // Predicated region
      $region53: #{causal_self_attention.4} parent=51 // pred_check
        %p747 = pneg %p158
      $region54: #{causal_self_attention.4} parent=51 // pred_check_branch
        %749 = sbr.rel (%p747) target = $region56
      $region55: #{causal_self_attention.4} parent=51 // pred_region
        %p750 = scmp.lt.s32.totalorder %s24, 1
        %s751 = scalar_select %p750, %s24, 1
        %p752 = scmp.lt.s32.totalorder %s25, 3
        %s753 = scalar_select %p752, %s25, 3
        %p754 = scmp.lt.s32.totalorder %s26, 0
        %s755 = scalar_select %p754, %s26, 0
        %s756 = sadd.s32 %s755, %s753
        %s757 = smul.addr %s751, 4
        %s758 = sadd.s32 %s756, %s757
        %s759 = smul.addr %s758, 8
        %s760 = scalar_lea.vmem %s3, %s759
      $region56: #{causal_self_attention.4} parent=51 // pred_fallthru
        _
    $region52: #{causal_self_attention.4} parent=5 // pred_fallthru
      _
  $region6: #{causal_self_attention.4} parent=0 // loop_footer
    %s13 = sadd.s32 1, %s9
  $region7: #{causal_self_attention.4} parent=0 // loop_footer_branch
    %8 = sbr.rel target = $region3
  $region8: #{causal_self_attention.4} parent=0 // loop_exit
    _

</llo_original>
